<compile_context>
chip_gen: v5e
topology: v5e:2x2
jax: 0.10.0
libtpu: 0.0.40
codegen_flags: <defaults>
</compile_context>

<pallas_src>
import math
import numpy as np
import jax
import jax.numpy as jnp
from jax import lax
from jax.experimental import pallas as pl
from jax.experimental.pallas import tpu as pltpu

# ---------------- configuration (matches the PyTorch module defaults) ----------------
BATCH = 2
IN_CH = 4
OUT_CH = 12
EXP_FACTOR = 2
EX_CH = IN_CH * EXP_FACTOR        # expansion channels == combined channels (add=True)
KSIZES = (1, 3, 5)
PMAX = max(KSIZES) // 2           # 2
H = W = 16
EPS = 1e-5

# lane-axis widths with batch folded onto lanes: lane = (b*W + w)*C + c
LCIN = BATCH * W * IN_CH          # 128
LCEX = BATCH * W * EX_CH          # 256
LCOUT = BATCH * W * OUT_CH        # 384

# rows of the packed "taps" buffer (each row is a (B*W*Cex,) lane vector, W-border pre-masked)
ROW_K5 = 0                        # 25 rows: k=5 taps, row = (hs+2)*5 + (ws+2)
ROW_K3 = 25                       # 9 rows : k=3 taps, row = ROW_K3 + (hs+1)*3 + (ws+1)
ROW_K1 = 34                       # 1 row  : k=1 tap
ROW_DB5 = 35                      # depthwise BN biases (k=5,3,1)
ROW_DB3 = 36
ROW_DB1 = 37
ROW_B1 = 38                       # pconv1 BN bias
N_TAP_ROWS = 39


# ---------------------------------- Pallas kernel ----------------------------------
def mscb_kernel(x_ref, w1_ref, tap_ref, w2_ref, wskip_ref, b2_ref, out_ref, pad_ref):
    """Whole (tiny) batch in one step; BN folded; channel shuffle folded into w2;
    W-border masks folded into the tap table; skip 1x1 fused into the output stage."""
    x = x_ref[...]                                                # (16, 128)

    def tap(row):                                                 # (1, LCEX) lane vector
        return tap_ref[pl.ds(row, 1), :]

    # ---- pconv1: block-diagonal 1x1 (+ folded BN) + ReLU6 ----
    p1 = jnp.clip(jnp.dot(x, w1_ref[...], preferred_element_type=jnp.float32)
                  + tap(ROW_B1), 0.0, 6.0)                        # (16, 256)

    # ---- stage p1 into an H-padded scratch (W/batch borders handled by pre-masked taps) ----
    pad_ref[pl.ds(0, PMAX), :] = jnp.zeros((PMAX, LCEX), jnp.float32)
    pad_ref[pl.ds(H + PMAX, PMAX), :] = jnp.zeros((PMAX, LCEX), jnp.float32)
    pad_ref[pl.ds(PMAX, H), :] = p1

    # ---- MSDC depthwise branches ----
    # k=1 branch straight from p1 (no accumulator, no buffer round-trip)
    acc1 = p1 * tap(ROW_K1)

    # k=5 / k=3 share the shifted (16,256) windows; wrap/border lanes are zero in the tap rows
    acc5 = None
    acc3 = None
    for hs in range(-PMAX, PMAX + 1):
        # H shift: static leading-dim offset into the padded scratch (center reuses p1)
        base = p1 if hs == 0 else pad_ref[pl.ds(hs + PMAX, H), :]
        for ws in range(-PMAX, PMAX + 1):
            if ws == 0:
                sh = base
            else:
                # W shift by ws pixels = lane roll by ws*Cex; out-of-range / cross-batch lanes
                # are killed by the zeros baked into the corresponding tap row.
                sh = pltpu.roll(base, (-ws * EX_CH) % LCEX, axis=1)
            t5 = sh * tap(ROW_K5 + (hs + 2) * 5 + (ws + 2))
            acc5 = t5 if acc5 is None else acc5 + t5
            if abs(hs) <= 1 and abs(ws) <= 1:
                t3 = sh * tap(ROW_K3 + (hs + 1) * 3 + (ws + 1))
                acc3 = t3 if acc3 is None else acc3 + t3

    # per-branch BN bias + ReLU6, then sum (add=True semantics)
    dout = (jnp.clip(acc5 + tap(ROW_DB5), 0.0, 6.0)
            + jnp.clip(acc3 + tap(ROW_DB3), 0.0, 6.0)
            + jnp.clip(acc1 + tap(ROW_DB1), 0.0, 6.0))            # (16, 256)

    # ---- pconv2 (channel shuffle + BN folded) + skip 1x1, both on the MXU, then store ----
    out_ref[...] = (jnp.dot(dout, w2_ref[...], preferred_element_type=jnp.float32)
                    + jnp.dot(x, wskip_ref[...], preferred_element_type=jnp.float32)
                    + b2_ref[...])                                # (16, 384), lane-dense


# --------------------------- wrapper: pack params & call ---------------------------
def pack_params(p):
    """Fold per-pixel 1x1 convs into block-diagonal matmuls over (batch, w) and build the
    depthwise tap table with the W-border masks baked in."""
    eye_bw = jnp.eye(BATCH * W, dtype=jnp.float32)
    w1big = jnp.kron(eye_bw, p["w1"])                      # (128, 256)
    w2big = jnp.kron(eye_bw, p["w2_eff"])                  # (256, 384), shuffle+BN folded
    wskipbig = jnp.kron(eye_bw, p["wskip"])                # (128, 384)
    b2row = jnp.tile(p["b2"], (BATCH * W,)).reshape(1, LCOUT)

    w_idx = np.arange(W)

    def lane_row(vec, ws=0):
        # per-channel row -> (1, B*W*Cex) lane vector, zeroed where w+ws falls outside [0, W)
        valid = ((w_idx + ws >= 0) & (w_idx + ws < W)).astype(np.float32)     # (W,)
        row = jnp.asarray(valid)[:, None] * vec[None, :]                      # (W, Cex)
        return jnp.tile(row.reshape(1, W * EX_CH), (1, BATCH))                # (1, LCEX)

    rows = []
    for hs in range(-PMAX, PMAX + 1):
        for ws in range(-PMAX, PMAX + 1):
            rows.append(lane_row(p["dw5"][hs + 2, ws + 2], ws))               # 25 rows
    for hs in range(-1, 2):
        for ws in range(-1, 2):
            rows.append(lane_row(p["dw3"][hs + 1, ws + 1], ws))               # 9 rows
    rows.append(lane_row(p["dw1"][0, 0]))                                     # k=1 tap
    rows.append(lane_row(p["dwb5"]))
    rows.append(lane_row(p["dwb3"]))
    rows.append(lane_row(p["dwb1"]))
    rows.append(lane_row(p["b1"]))
    taps = jnp.concatenate(rows, axis=0)                   # (39, 256)
    return w1big, taps, w2big, wskipbig, b2row


def mscb_pallas(x_nchw, params):
    """x_nchw: (B, Cin, H, W) float32 (PyTorch layout). Returns (B, Cout, H, W)."""
    b = x_nchw.shape[0]
    assert b == BATCH, "kernel constants are specialized for BATCH=2"
    # lane-dense layout with batch folded onto lanes: (H, B*W*Cin), lane = (b*W+w)*Cin + c
    x_wc = jnp.transpose(x_nchw, (2, 0, 3, 1)).reshape(H, LCIN)
    w1big, taps, w2big, wskipbig, b2row = pack_params(params)

    out = pl.pallas_call(
        mscb_kernel,
        out_shape=jax.ShapeDtypeStruct((H, LCOUT), jnp.float32),
        grid_spec=pltpu.PrefetchScalarGridSpec(
            num_scalar_prefetch=0,
            grid=(1,),                                              # single step: overhead-bound size
            in_specs=[
                pl.BlockSpec((H, LCIN), lambda i: (0, 0)),          # x (lane-dense, batch on lanes)
                pl.BlockSpec((LCIN, LCEX), lambda i: (0, 0)),       # pconv1 block-diag weight
                pl.BlockSpec((N_TAP_ROWS, LCEX), lambda i: (0, 0)), # pre-masked taps + biases
                pl.BlockSpec((LCEX, LCOUT), lambda i: (0, 0)),      # pconv2 (shuffled + BN)
                pl.BlockSpec((LCIN, LCOUT), lambda i: (0, 0)),      # skip 1x1 block-diag weight
                pl.BlockSpec((1, LCOUT), lambda i: (0, 0)),         # pconv2 bias
            ],
            out_specs=pl.BlockSpec((H, LCOUT), lambda i: (0, 0)),
            scratch_shapes=[pltpu.VMEM((H + 2 * PMAX, LCEX), jnp.float32)],
        ),
        compiler_params=pltpu.CompilerParams(dimension_semantics=("arbitrary",)),
    )(x_wc, w1big, taps, w2big, wskipbig, b2row)

    # back to PyTorch NCHW
    return jnp.transpose(out.reshape(H, b, W, OUT_CH), (1, 3, 0, 2))


# ------------------------- plain-JAX glue: params & reference -------------------------
def make_params(key):
    ks = jax.random.split(key, 32)
    i = iter(range(32))
    nrm = lambda shape, s=0.2: s * jax.random.normal(ks[next(i)], shape, jnp.float32)

    def bn(c):
        gamma = 1.0 + nrm((c,), 0.1)
        beta = nrm((c,), 0.1)
        mean = nrm((c,), 0.05)
        var = 1.0 + jnp.abs(nrm((c,), 0.1))
        scale = gamma / jnp.sqrt(var + EPS)
        bias = beta - mean * scale
        return scale, bias

    p = {}
    # pconv1: torch weight (Cex, Cin, 1, 1) -> folded (Cin, Cex)
    w1 = nrm((EX_CH, IN_CH))
    s1, b1 = bn(EX_CH)
    p["w1"] = (w1 * s1[:, None]).T
    p["b1"] = b1

    # depthwise convs: torch weight (Cex, 1, k, k) -> folded (k, k, Cex)
    for k in KSIZES:
        wk = nrm((EX_CH, 1, k, k))
        sk, bk = bn(EX_CH)
        p[f"dw{k}"] = jnp.transpose(wk[:, 0] * sk[:, None, None], (1, 2, 0))
        p[f"dwb{k}"] = bk

    # pconv2: torch weight (Cout, Ccomb, 1, 1) -> folded (Ccomb, Cout)
    w2 = nrm((OUT_CH, EX_CH))
    s2, b2 = bn(OUT_CH)
    p["w2"] = (w2 * s2[:, None]).T
    p["b2"] = b2

    # channel shuffle (groups = gcd(Ccomb, Cout)) folded into w2's input axis
    g = math.gcd(EX_CH, OUT_CH)
    cpg = EX_CH // g
    perm = np.arange(EX_CH).reshape(g, cpg).T.reshape(-1)      # shuffled[c] = dout[perm[c]]
    inv_perm = np.argsort(perm)
    p["perm"] = jnp.asarray(perm)
    p["w2_eff"] = p["w2"][jnp.asarray(inv_perm), :]

    # skip 1x1 conv: torch weight (Cout, Cin, 1, 1) -> (Cin, Cout)
    p["wskip"] = nrm((OUT_CH, IN_CH)).T
    return p


def mscb_reference(x_nchw, p):
    """Pure-JAX (lax.conv) reference with the same folded parameters. NCHW in/out."""
    x = jnp.transpose(x_nchw, (0, 2, 3, 1))                        # NHWC
    p1 = jnp.einsum("nhwc,cd->nhwd", x, p["w1"]) + p["b1"].reshape(1, 1, 1, -1)
    p1 = jnp.clip(p1, 0.0, 6.0)
    dout = jnp.zeros(p1.shape, jnp.float32)
    for k in KSIZES:
        wk = p[f"dw{k}"].reshape(k, k, 1, EX_CH)                   # HWIO, depthwise
        y = lax.conv_general_dilated(
            p1, wk, window_strides=(1, 1),
            padding=((k // 2, k // 2), (k // 2, k // 2)),
            dimension_numbers=("NHWC", "HWIO", "NHWC"),
            feature_group_count=EX_CH)
        dout = dout + jnp.clip(y + p[f"dwb{k}"].reshape(1, 1, 1, -1), 0.0, 6.0)
    dout = dout[..., p["perm"]]                                    # explicit channel shuffle
    out = jnp.einsum("nhwc,cd->nhwd", dout, p["w2"]) + p["b2"].reshape(1, 1, 1, -1)
    skip = jnp.einsum("nhwc,cd->nhwd", x, p["wskip"])
    return jnp.transpose(skip + out, (0, 3, 1, 2))                 # NCHW


if __name__ == "__main__":
    key = jax.random.PRNGKey(0)
    kx, kp = jax.random.split(key)
    # input matches the PyTorch module's NCHW (2, 4, 16, 16)
    x = jax.random.normal(kx, (BATCH, IN_CH, H, W), jnp.float32)
    params = make_params(kp)

    fwd = jax.jit(mscb_pallas)
    out = jax.block_until_ready(fwd(x, params))
    ref = jax.block_until_ready(mscb_reference(x, params))
    np.testing.assert_allclose(np.asarray(out), np.asarray(ref), rtol=2e-4, atol=2e-4)

    print("KERNEL_OK")
</pallas_src>

<mosaic_0001>
module attributes {stable_mosaic.version = 11 : i64} {
  func.func @mscb_kernel(%arg0: i32, %arg1: memref<16x128xf32, #tpu.memory_space<vmem>>, %arg2: memref<128x256xf32, #tpu.memory_space<vmem>>, %arg3: memref<39x256xf32, #tpu.memory_space<vmem>>, %arg4: memref<256x384xf32, #tpu.memory_space<vmem>>, %arg5: memref<128x384xf32, #tpu.memory_space<vmem>>, %arg6: memref<1x384xf32, #tpu.memory_space<vmem>>, %arg7: memref<16x384xf32, #tpu.memory_space<vmem>>, %arg8: memref<20x256xf32, #tpu.memory_space<vmem>>) attributes {dimension_semantics = [#tpu.dimension_semantics<arbitrary>], iteration_bounds = array<i64: 1>, scalar_prefetch = 0 : i64, scratch_operands = 1 : i64, tpu.core_type = #tpu.core_type<tc>, window_params = [{pipeline_mode = #tpu.pipeline_mode<synchronous>, transform_indices = @transform_0, window_bounds = array<i64: 16, 128>}, {pipeline_mode = #tpu.pipeline_mode<synchronous>, transform_indices = @transform_1, window_bounds = array<i64: 128, 256>}, {pipeline_mode = #tpu.pipeline_mode<synchronous>, transform_indices = @transform_2, window_bounds = array<i64: 39, 256>}, {pipeline_mode = #tpu.pipeline_mode<synchronous>, transform_indices = @transform_3, window_bounds = array<i64: 256, 384>}, {pipeline_mode = #tpu.pipeline_mode<synchronous>, transform_indices = @transform_4, window_bounds = array<i64: 128, 384>}, {pipeline_mode = #tpu.pipeline_mode<synchronous>, transform_indices = @transform_5, window_bounds = array<i64: 1, 384>}, {pipeline_mode = #tpu.pipeline_mode<synchronous>, transform_indices = @transform_6, window_bounds = array<i64: 16, 384>}]} {
    %c0 = arith.constant 0 : index
    %c0_0 = arith.constant 0 : index
    %0 = vector.load %arg1[%c0, %c0_0] : memref<16x128xf32, #tpu.memory_space<vmem>>, vector<16x128xf32>
    %c0_1 = arith.constant 0 : index
    %c0_2 = arith.constant 0 : index
    %1 = vector.load %arg2[%c0_1, %c0_2] : memref<128x256xf32, #tpu.memory_space<vmem>>, vector<128x256xf32>
    %cst = arith.constant dense<0.000000e+00> : vector<16x256xf32>
    %2 = tpu.matmul %0, %1, %cst {dimension_numbers = #tpu.dot_dimension_numbers<[1], [0], [0], [1], [0, 0, 1, 1], [], []>} : vector<16x128xf32>, vector<128x256xf32>, vector<16x256xf32> -> vector<16x256xf32>
    %c38 = arith.constant 38 : index
    %c0_3 = arith.constant 0 : index
    %3 = vector.load %arg3[%c38, %c0_3] : memref<39x256xf32, #tpu.memory_space<vmem>>, vector<1x256xf32>
    %4 = vector.broadcast %3 : vector<1x256xf32> to vector<16x256xf32>
    %5 = arith.addf %2, %4 : vector<16x256xf32>
    %cst_4 = arith.constant 0.000000e+00 : f32
    %cst_5 = arith.constant 6.000000e+00 : f32
    %6 = vector.broadcast %cst_4 : f32 to vector<16x256xf32>
    %7 = arith.maximumf %6, %5 : vector<16x256xf32>
    %8 = vector.broadcast %cst_5 : f32 to vector<16x256xf32>
    %9 = arith.minimumf %8, %7 : vector<16x256xf32>
    %cst_6 = arith.constant 0.000000e+00 : f32
    %10 = vector.broadcast %cst_6 : f32 to vector<2x256xf32>
    %c0_7 = arith.constant 0 : index
    %c0_8 = arith.constant 0 : index
    %11 = vector.load %arg8[%c0_7, %c0_8] : memref<20x256xf32, #tpu.memory_space<vmem>>, vector<2x256xf32>
    tpu.vector_store %arg8[%c0_7, %c0_8], %10 {strides = array<i32>} : memref<20x256xf32, #tpu.memory_space<vmem>>, vector<2x256xf32>,
    %cst_9 = arith.constant 0.000000e+00 : f32
    %12 = vector.broadcast %cst_9 : f32 to vector<2x256xf32>
    %c18 = arith.constant 18 : index
    %c0_10 = arith.constant 0 : index
    %13 = vector.load %arg8[%c18, %c0_10] : memref<20x256xf32, #tpu.memory_space<vmem>>, vector<2x256xf32>
    tpu.vector_store %arg8[%c18, %c0_10], %12 {strides = array<i32>} : memref<20x256xf32, #tpu.memory_space<vmem>>, vector<2x256xf32>,
    %c2 = arith.constant 2 : index
    %c0_11 = arith.constant 0 : index
    %14 = vector.load %arg8[%c2, %c0_11] : memref<20x256xf32, #tpu.memory_space<vmem>>, vector<16x256xf32>
    tpu.vector_store %arg8[%c2, %c0_11], %9 {strides = array<i32>} : memref<20x256xf32, #tpu.memory_space<vmem>>, vector<16x256xf32>,
    %c34 = arith.constant 34 : index
    %c0_12 = arith.constant 0 : index
    %15 = vector.load %arg3[%c34, %c0_12] : memref<39x256xf32, #tpu.memory_space<vmem>>, vector<1x256xf32>
    %16 = vector.broadcast %15 : vector<1x256xf32> to vector<16x256xf32>
    %17 = arith.mulf %9, %16 : vector<16x256xf32>
    %c0_13 = arith.constant 0 : index
    %c0_14 = arith.constant 0 : index
    %18 = vector.load %arg8[%c0_13, %c0_14] : memref<20x256xf32, #tpu.memory_space<vmem>>, vector<16x256xf32>
    %c16_i32 = arith.constant 16 : i32
    %19 = tpu.dynamic_rotate %18 by %c16_i32 dim 1 : vector<16x256xf32>, i32 -> vector<16x256xf32>
    %c0_15 = arith.constant 0 : index
    %c0_16 = arith.constant 0 : index
    %20 = vector.load %arg3[%c0_15, %c0_16] : memref<39x256xf32, #tpu.memory_space<vmem>>, vector<1x256xf32>
    %21 = vector.broadcast %20 : vector<1x256xf32> to vector<16x256xf32>
    %22 = arith.mulf %19, %21 : vector<16x256xf32>
    %c8_i32 = arith.constant 8 : i32
    %23 = tpu.dynamic_rotate %18 by %c8_i32 dim 1 : vector<16x256xf32>, i32 -> vector<16x256xf32>
    %c1 = arith.constant 1 : index
    %c0_17 = arith.constant 0 : index
    %24 = vector.load %arg3[%c1, %c0_17] : memref<39x256xf32, #tpu.memory_space<vmem>>, vector<1x256xf32>
    %25 = vector.broadcast %24 : vector<1x256xf32> to vector<16x256xf32>
    %26 = arith.mulf %23, %25 : vector<16x256xf32>
    %27 = arith.addf %22, %26 : vector<16x256xf32>
    %c2_18 = arith.constant 2 : index
    %c0_19 = arith.constant 0 : index
    %28 = vector.load %arg3[%c2_18, %c0_19] : memref<39x256xf32, #tpu.memory_space<vmem>>, vector<1x256xf32>
    %29 = vector.broadcast %28 : vector<1x256xf32> to vector<16x256xf32>
    %30 = arith.mulf %18, %29 : vector<16x256xf32>
    %31 = arith.addf %27, %30 : vector<16x256xf32>
    %c248_i32 = arith.constant 248 : i32
    %32 = tpu.dynamic_rotate %18 by %c248_i32 dim 1 : vector<16x256xf32>, i32 -> vector<16x256xf32>
    %c3 = arith.constant 3 : index
    %c0_20 = arith.constant 0 : index
    %33 = vector.load %arg3[%c3, %c0_20] : memref<39x256xf32, #tpu.memory_space<vmem>>, vector<1x256xf32>
    %34 = vector.broadcast %33 : vector<1x256xf32> to vector<16x256xf32>
    %35 = arith.mulf %32, %34 : vector<16x256xf32>
    %36 = arith.addf %31, %35 : vector<16x256xf32>
    %c240_i32 = arith.constant 240 : i32
    %37 = tpu.dynamic_rotate %18 by %c240_i32 dim 1 : vector<16x256xf32>, i32 -> vector<16x256xf32>
    %c4 = arith.constant 4 : index
    %c0_21 = arith.constant 0 : index
    %38 = vector.load %arg3[%c4, %c0_21] : memref<39x256xf32, #tpu.memory_space<vmem>>, vector<1x256xf32>
    %39 = vector.broadcast %38 : vector<1x256xf32> to vector<16x256xf32>
    %40 = arith.mulf %37, %39 : vector<16x256xf32>
    %41 = arith.addf %36, %40 : vector<16x256xf32>
    %c1_22 = arith.constant 1 : index
    %c0_23 = arith.constant 0 : index
    %42 = vector.load %arg8[%c1_22, %c0_23] : memref<20x256xf32, #tpu.memory_space<vmem>>, vector<16x256xf32>
    %c16_i32_24 = arith.constant 16 : i32
    %43 = tpu.dynamic_rotate %42 by %c16_i32_24 dim 1 : vector<16x256xf32>, i32 -> vector<16x256xf32>
    %c5 = arith.constant 5 : index
    %c0_25 = arith.constant 0 : index
    %44 = vector.load %arg3[%c5, %c0_25] : memref<39x256xf32, #tpu.memory_space<vmem>>, vector<1x256xf32>
    %45 = vector.broadcast %44 : vector<1x256xf32> to vector<16x256xf32>
    %46 = arith.mulf %43, %45 : vector<16x256xf32>
    %47 = arith.addf %41, %46 : vector<16x256xf32>
    %c8_i32_26 = arith.constant 8 : i32
    %48 = tpu.dynamic_rotate %42 by %c8_i32_26 dim 1 : vector<16x256xf32>, i32 -> vector<16x256xf32>
    %c6 = arith.constant 6 : index
    %c0_27 = arith.constant 0 : index
    %49 = vector.load %arg3[%c6, %c0_27] : memref<39x256xf32, #tpu.memory_space<vmem>>, vector<1x256xf32>
    %50 = vector.broadcast %49 : vector<1x256xf32> to vector<16x256xf32>
    %51 = arith.mulf %48, %50 : vector<16x256xf32>
    %52 = arith.addf %47, %51 : vector<16x256xf32>
    %c25 = arith.constant 25 : index
    %c0_28 = arith.constant 0 : index
    %53 = vector.load %arg3[%c25, %c0_28] : memref<39x256xf32, #tpu.memory_space<vmem>>, vector<1x256xf32>
    %54 = vector.broadcast %53 : vector<1x256xf32> to vector<16x256xf32>
    %55 = arith.mulf %48, %54 : vector<16x256xf32>
    %c7 = arith.constant 7 : index
    %c0_29 = arith.constant 0 : index
    %56 = vector.load %arg3[%c7, %c0_29] : memref<39x256xf32, #tpu.memory_space<vmem>>, vector<1x256xf32>
    %57 = vector.broadcast %56 : vector<1x256xf32> to vector<16x256xf32>
    %58 = arith.mulf %42, %57 : vector<16x256xf32>
    %59 = arith.addf %52, %58 : vector<16x256xf32>
    %c26 = arith.constant 26 : index
    %c0_30 = arith.constant 0 : index
    %60 = vector.load %arg3[%c26, %c0_30] : memref<39x256xf32, #tpu.memory_space<vmem>>, vector<1x256xf32>
    %61 = vector.broadcast %60 : vector<1x256xf32> to vector<16x256xf32>
    %62 = arith.mulf %42, %61 : vector<16x256xf32>
    %63 = arith.addf %55, %62 : vector<16x256xf32>
    %c248_i32_31 = arith.constant 248 : i32
    %64 = tpu.dynamic_rotate %42 by %c248_i32_31 dim 1 : vector<16x256xf32>, i32 -> vector<16x256xf32>
    %c8 = arith.constant 8 : index
    %c0_32 = arith.constant 0 : index
    %65 = vector.load %arg3[%c8, %c0_32] : memref<39x256xf32, #tpu.memory_space<vmem>>, vector<1x256xf32>
    %66 = vector.broadcast %65 : vector<1x256xf32> to vector<16x256xf32>
    %67 = arith.mulf %64, %66 : vector<16x256xf32>
    %68 = arith.addf %59, %67 : vector<16x256xf32>
    %c27 = arith.constant 27 : index
    %c0_33 = arith.constant 0 : index
    %69 = vector.load %arg3[%c27, %c0_33] : memref<39x256xf32, #tpu.memory_space<vmem>>, vector<1x256xf32>
    %70 = vector.broadcast %69 : vector<1x256xf32> to vector<16x256xf32>
    %71 = arith.mulf %64, %70 : vector<16x256xf32>
    %72 = arith.addf %63, %71 : vector<16x256xf32>
    %c240_i32_34 = arith.constant 240 : i32
    %73 = tpu.dynamic_rotate %42 by %c240_i32_34 dim 1 : vector<16x256xf32>, i32 -> vector<16x256xf32>
    %c9 = arith.constant 9 : index
    %c0_35 = arith.constant 0 : index
    %74 = vector.load %arg3[%c9, %c0_35] : memref<39x256xf32, #tpu.memory_space<vmem>>, vector<1x256xf32>
    %75 = vector.broadcast %74 : vector<1x256xf32> to vector<16x256xf32>
    %76 = arith.mulf %73, %75 : vector<16x256xf32>
    %77 = arith.addf %68, %76 : vector<16x256xf32>
    %c16_i32_36 = arith.constant 16 : i32
    %78 = tpu.dynamic_rotate %9 by %c16_i32_36 dim 1 : vector<16x256xf32>, i32 -> vector<16x256xf32>
    %c10 = arith.constant 10 : index
    %c0_37 = arith.constant 0 : index
    %79 = vector.load %arg3[%c10, %c0_37] : memref<39x256xf32, #tpu.memory_space<vmem>>, vector<1x256xf32>
    %80 = vector.broadcast %79 : vector<1x256xf32> to vector<16x256xf32>
    %81 = arith.mulf %78, %80 : vector<16x256xf32>
    %82 = arith.addf %77, %81 : vector<16x256xf32>
    %c8_i32_38 = arith.constant 8 : i32
    %83 = tpu.dynamic_rotate %9 by %c8_i32_38 dim 1 : vector<16x256xf32>, i32 -> vector<16x256xf32>
    %c11 = arith.constant 11 : index
    %c0_39 = arith.constant 0 : index
    %84 = vector.load %arg3[%c11, %c0_39] : memref<39x256xf32, #tpu.memory_space<vmem>>, vector<1x256xf32>
    %85 = vector.broadcast %84 : vector<1x256xf32> to vector<16x256xf32>
    %86 = arith.mulf %83, %85 : vector<16x256xf32>
    %87 = arith.addf %82, %86 : vector<16x256xf32>
    %c28 = arith.constant 28 : index
    %c0_40 = arith.constant 0 : index
    %88 = vector.load %arg3[%c28, %c0_40] : memref<39x256xf32, #tpu.memory_space<vmem>>, vector<1x256xf32>
    %89 = vector.broadcast %88 : vector<1x256xf32> to vector<16x256xf32>
    %90 = arith.mulf %83, %89 : vector<16x256xf32>
    %91 = arith.addf %72, %90 : vector<16x256xf32>
    %c12 = arith.constant 12 : index
    %c0_41 = arith.constant 0 : index
    %92 = vector.load %arg3[%c12, %c0_41] : memref<39x256xf32, #tpu.memory_space<vmem>>, vector<1x256xf32>
    %93 = vector.broadcast %92 : vector<1x256xf32> to vector<16x256xf32>
    %94 = arith.mulf %9, %93 : vector<16x256xf32>
    %95 = arith.addf %87, %94 : vector<16x256xf32>
    %c29 = arith.constant 29 : index
    %c0_42 = arith.constant 0 : index
    %96 = vector.load %arg3[%c29, %c0_42] : memref<39x256xf32, #tpu.memory_space<vmem>>, vector<1x256xf32>
    %97 = vector.broadcast %96 : vector<1x256xf32> to vector<16x256xf32>
    %98 = arith.mulf %9, %97 : vector<16x256xf32>
    %99 = arith.addf %91, %98 : vector<16x256xf32>
    %c248_i32_43 = arith.constant 248 : i32
    %100 = tpu.dynamic_rotate %9 by %c248_i32_43 dim 1 : vector<16x256xf32>, i32 -> vector<16x256xf32>
    %c13 = arith.constant 13 : index
    %c0_44 = arith.constant 0 : index
    %101 = vector.load %arg3[%c13, %c0_44] : memref<39x256xf32, #tpu.memory_space<vmem>>, vector<1x256xf32>
    %102 = vector.broadcast %101 : vector<1x256xf32> to vector<16x256xf32>
    %103 = arith.mulf %100, %102 : vector<16x256xf32>
    %104 = arith.addf %95, %103 : vector<16x256xf32>
    %c30 = arith.constant 30 : index
    %c0_45 = arith.constant 0 : index
    %105 = vector.load %arg3[%c30, %c0_45] : memref<39x256xf32, #tpu.memory_space<vmem>>, vector<1x256xf32>
    %106 = vector.broadcast %105 : vector<1x256xf32> to vector<16x256xf32>
    %107 = arith.mulf %100, %106 : vector<16x256xf32>
    %108 = arith.addf %99, %107 : vector<16x256xf32>
    %c240_i32_46 = arith.constant 240 : i32
    %109 = tpu.dynamic_rotate %9 by %c240_i32_46 dim 1 : vector<16x256xf32>, i32 -> vector<16x256xf32>
    %c14 = arith.constant 14 : index
    %c0_47 = arith.constant 0 : index
    %110 = vector.load %arg3[%c14, %c0_47] : memref<39x256xf32, #tpu.memory_space<vmem>>, vector<1x256xf32>
    %111 = vector.broadcast %110 : vector<1x256xf32> to vector<16x256xf32>
    %112 = arith.mulf %109, %111 : vector<16x256xf32>
    %113 = arith.addf %104, %112 : vector<16x256xf32>
    %c3_48 = arith.constant 3 : index
    %c0_49 = arith.constant 0 : index
    %114 = vector.load %arg8[%c3_48, %c0_49] : memref<20x256xf32, #tpu.memory_space<vmem>>, vector<16x256xf32>
    %c16_i32_50 = arith.constant 16 : i32
    %115 = tpu.dynamic_rotate %114 by %c16_i32_50 dim 1 : vector<16x256xf32>, i32 -> vector<16x256xf32>
    %c15 = arith.constant 15 : index
    %c0_51 = arith.constant 0 : index
    %116 = vector.load %arg3[%c15, %c0_51] : memref<39x256xf32, #tpu.memory_space<vmem>>, vector<1x256xf32>
    %117 = vector.broadcast %116 : vector<1x256xf32> to vector<16x256xf32>
    %118 = arith.mulf %115, %117 : vector<16x256xf32>
    %119 = arith.addf %113, %118 : vector<16x256xf32>
    %c8_i32_52 = arith.constant 8 : i32
    %120 = tpu.dynamic_rotate %114 by %c8_i32_52 dim 1 : vector<16x256xf32>, i32 -> vector<16x256xf32>
    %c16 = arith.constant 16 : index
    %c0_53 = arith.constant 0 : index
    %121 = vector.load %arg3[%c16, %c0_53] : memref<39x256xf32, #tpu.memory_space<vmem>>, vector<1x256xf32>
    %122 = vector.broadcast %121 : vector<1x256xf32> to vector<16x256xf32>
    %123 = arith.mulf %120, %122 : vector<16x256xf32>
    %124 = arith.addf %119, %123 : vector<16x256xf32>
    %c31 = arith.constant 31 : index
    %c0_54 = arith.constant 0 : index
    %125 = vector.load %arg3[%c31, %c0_54] : memref<39x256xf32, #tpu.memory_space<vmem>>, vector<1x256xf32>
    %126 = vector.broadcast %125 : vector<1x256xf32> to vector<16x256xf32>
    %127 = arith.mulf %120, %126 : vector<16x256xf32>
    %128 = arith.addf %108, %127 : vector<16x256xf32>
    %c17 = arith.constant 17 : index
    %c0_55 = arith.constant 0 : index
    %129 = vector.load %arg3[%c17, %c0_55] : memref<39x256xf32, #tpu.memory_space<vmem>>, vector<1x256xf32>
    %130 = vector.broadcast %129 : vector<1x256xf32> to vector<16x256xf32>
    %131 = arith.mulf %114, %130 : vector<16x256xf32>
    %132 = arith.addf %124, %131 : vector<16x256xf32>
    %c32 = arith.constant 32 : index
    %c0_56 = arith.constant 0 : index
    %133 = vector.load %arg3[%c32, %c0_56] : memref<39x256xf32, #tpu.memory_space<vmem>>, vector<1x256xf32>
    %134 = vector.broadcast %133 : vector<1x256xf32> to vector<16x256xf32>
    %135 = arith.mulf %114, %134 : vector<16x256xf32>
    %136 = arith.addf %128, %135 : vector<16x256xf32>
    %c248_i32_57 = arith.constant 248 : i32
    %137 = tpu.dynamic_rotate %114 by %c248_i32_57 dim 1 : vector<16x256xf32>, i32 -> vector<16x256xf32>
    %c18_58 = arith.constant 18 : index
    %c0_59 = arith.constant 0 : index
    %138 = vector.load %arg3[%c18_58, %c0_59] : memref<39x256xf32, #tpu.memory_space<vmem>>, vector<1x256xf32>
    %139 = vector.broadcast %138 : vector<1x256xf32> to vector<16x256xf32>
    %140 = arith.mulf %137, %139 : vector<16x256xf32>
    %141 = arith.addf %132, %140 : vector<16x256xf32>
    %c33 = arith.constant 33 : index
    %c0_60 = arith.constant 0 : index
    %142 = vector.load %arg3[%c33, %c0_60] : memref<39x256xf32, #tpu.memory_space<vmem>>, vector<1x256xf32>
    %143 = vector.broadcast %142 : vector<1x256xf32> to vector<16x256xf32>
    %144 = arith.mulf %137, %143 : vector<16x256xf32>
    %145 = arith.addf %136, %144 : vector<16x256xf32>
    %c240_i32_61 = arith.constant 240 : i32
    %146 = tpu.dynamic_rotate %114 by %c240_i32_61 dim 1 : vector<16x256xf32>, i32 -> vector<16x256xf32>
    %c19 = arith.constant 19 : index
    %c0_62 = arith.constant 0 : index
    %147 = vector.load %arg3[%c19, %c0_62] : memref<39x256xf32, #tpu.memory_space<vmem>>, vector<1x256xf32>
    %148 = vector.broadcast %147 : vector<1x256xf32> to vector<16x256xf32>
    %149 = arith.mulf %146, %148 : vector<16x256xf32>
    %150 = arith.addf %141, %149 : vector<16x256xf32>
    %c4_63 = arith.constant 4 : index
    %c0_64 = arith.constant 0 : index
    %151 = vector.load %arg8[%c4_63, %c0_64] : memref<20x256xf32, #tpu.memory_space<vmem>>, vector<16x256xf32>
    %c16_i32_65 = arith.constant 16 : i32
    %152 = tpu.dynamic_rotate %151 by %c16_i32_65 dim 1 : vector<16x256xf32>, i32 -> vector<16x256xf32>
    %c20 = arith.constant 20 : index
    %c0_66 = arith.constant 0 : index
    %153 = vector.load %arg3[%c20, %c0_66] : memref<39x256xf32, #tpu.memory_space<vmem>>, vector<1x256xf32>
    %154 = vector.broadcast %153 : vector<1x256xf32> to vector<16x256xf32>
    %155 = arith.mulf %152, %154 : vector<16x256xf32>
    %156 = arith.addf %150, %155 : vector<16x256xf32>
    %c8_i32_67 = arith.constant 8 : i32
    %157 = tpu.dynamic_rotate %151 by %c8_i32_67 dim 1 : vector<16x256xf32>, i32 -> vector<16x256xf32>
    %c21 = arith.constant 21 : index
    %c0_68 = arith.constant 0 : index
    %158 = vector.load %arg3[%c21, %c0_68] : memref<39x256xf32, #tpu.memory_space<vmem>>, vector<1x256xf32>
    %159 = vector.broadcast %158 : vector<1x256xf32> to vector<16x256xf32>
    %160 = arith.mulf %157, %159 : vector<16x256xf32>
    %161 = arith.addf %156, %160 : vector<16x256xf32>
    %c22 = arith.constant 22 : index
    %c0_69 = arith.constant 0 : index
    %162 = vector.load %arg3[%c22, %c0_69] : memref<39x256xf32, #tpu.memory_space<vmem>>, vector<1x256xf32>
    %163 = vector.broadcast %162 : vector<1x256xf32> to vector<16x256xf32>
    %164 = arith.mulf %151, %163 : vector<16x256xf32>
    %165 = arith.addf %161, %164 : vector<16x256xf32>
    %c248_i32_70 = arith.constant 248 : i32
    %166 = tpu.dynamic_rotate %151 by %c248_i32_70 dim 1 : vector<16x256xf32>, i32 -> vector<16x256xf32>
    %c23 = arith.constant 23 : index
    %c0_71 = arith.constant 0 : index
    %167 = vector.load %arg3[%c23, %c0_71] : memref<39x256xf32, #tpu.memory_space<vmem>>, vector<1x256xf32>
    %168 = vector.broadcast %167 : vector<1x256xf32> to vector<16x256xf32>
    %169 = arith.mulf %166, %168 : vector<16x256xf32>
    %170 = arith.addf %165, %169 : vector<16x256xf32>
    %c240_i32_72 = arith.constant 240 : i32
    %171 = tpu.dynamic_rotate %151 by %c240_i32_72 dim 1 : vector<16x256xf32>, i32 -> vector<16x256xf32>
    %c24 = arith.constant 24 : index
    %c0_73 = arith.constant 0 : index
    %172 = vector.load %arg3[%c24, %c0_73] : memref<39x256xf32, #tpu.memory_space<vmem>>, vector<1x256xf32>
    %173 = vector.broadcast %172 : vector<1x256xf32> to vector<16x256xf32>
    %174 = arith.mulf %171, %173 : vector<16x256xf32>
    %175 = arith.addf %170, %174 : vector<16x256xf32>
    %c35 = arith.constant 35 : index
    %c0_74 = arith.constant 0 : index
    %176 = vector.load %arg3[%c35, %c0_74] : memref<39x256xf32, #tpu.memory_space<vmem>>, vector<1x256xf32>
    %177 = vector.broadcast %176 : vector<1x256xf32> to vector<16x256xf32>
    %178 = arith.addf %175, %177 : vector<16x256xf32>
    %cst_75 = arith.constant 0.000000e+00 : f32
    %cst_76 = arith.constant 6.000000e+00 : f32
    %179 = vector.broadcast %cst_75 : f32 to vector<16x256xf32>
    %180 = arith.maximumf %179, %178 : vector<16x256xf32>
    %181 = vector.broadcast %cst_76 : f32 to vector<16x256xf32>
    %182 = arith.minimumf %181, %180 : vector<16x256xf32>
    %c36 = arith.constant 36 : index
    %c0_77 = arith.constant 0 : index
    %183 = vector.load %arg3[%c36, %c0_77] : memref<39x256xf32, #tpu.memory_space<vmem>>, vector<1x256xf32>
    %184 = vector.broadcast %183 : vector<1x256xf32> to vector<16x256xf32>
    %185 = arith.addf %145, %184 : vector<16x256xf32>
    %cst_78 = arith.constant 0.000000e+00 : f32
    %cst_79 = arith.constant 6.000000e+00 : f32
    %186 = vector.broadcast %cst_78 : f32 to vector<16x256xf32>
    %187 = arith.maximumf %186, %185 : vector<16x256xf32>
    %188 = vector.broadcast %cst_79 : f32 to vector<16x256xf32>
    %189 = arith.minimumf %188, %187 : vector<16x256xf32>
    %190 = arith.addf %182, %189 : vector<16x256xf32>
    %c37 = arith.constant 37 : index
    %c0_80 = arith.constant 0 : index
    %191 = vector.load %arg3[%c37, %c0_80] : memref<39x256xf32, #tpu.memory_space<vmem>>, vector<1x256xf32>
    %192 = vector.broadcast %191 : vector<1x256xf32> to vector<16x256xf32>
    %193 = arith.addf %17, %192 : vector<16x256xf32>
    %cst_81 = arith.constant 0.000000e+00 : f32
    %cst_82 = arith.constant 6.000000e+00 : f32
    %194 = vector.broadcast %cst_81 : f32 to vector<16x256xf32>
    %195 = arith.maximumf %194, %193 : vector<16x256xf32>
    %196 = vector.broadcast %cst_82 : f32 to vector<16x256xf32>
    %197 = arith.minimumf %196, %195 : vector<16x256xf32>
    %198 = arith.addf %190, %197 : vector<16x256xf32>
    %c0_83 = arith.constant 0 : index
    %c0_84 = arith.constant 0 : index
    %199 = vector.load %arg4[%c0_83, %c0_84] : memref<256x384xf32, #tpu.memory_space<vmem>>, vector<256x384xf32>
    %cst_85 = arith.constant dense<0.000000e+00> : vector<16x384xf32>
    %200 = tpu.matmul %198, %199, %cst_85 {dimension_numbers = #tpu.dot_dimension_numbers<[1], [0], [0], [1], [0, 0, 1, 1], [], []>} : vector<16x256xf32>, vector<256x384xf32>, vector<16x384xf32> -> vector<16x384xf32>
    %c0_86 = arith.constant 0 : index
    %c0_87 = arith.constant 0 : index
    %201 = vector.load %arg5[%c0_86, %c0_87] : memref<128x384xf32, #tpu.memory_space<vmem>>, vector<128x384xf32>
    %cst_88 = arith.constant dense<0.000000e+00> : vector<16x384xf32>
    %202 = tpu.matmul %0, %201, %cst_88 {dimension_numbers = #tpu.dot_dimension_numbers<[1], [0], [0], [1], [0, 0, 1, 1], [], []>} : vector<16x128xf32>, vector<128x384xf32>, vector<16x384xf32> -> vector<16x384xf32>
    %203 = arith.addf %200, %202 : vector<16x384xf32>
    %c0_89 = arith.constant 0 : index
    %c0_90 = arith.constant 0 : index
    %204 = vector.load %arg6[%c0_89, %c0_90] : memref<1x384xf32, #tpu.memory_space<vmem>>, vector<1x384xf32>
    %205 = vector.broadcast %204 : vector<1x384xf32> to vector<16x384xf32>
    %206 = arith.addf %203, %205 : vector<16x384xf32>
    %c0_91 = arith.constant 0 : index
    %c0_92 = arith.constant 0 : index
    %207 = vector.load %arg7[%c0_91, %c0_92] : memref<16x384xf32, #tpu.memory_space<vmem>>, vector<16x384xf32>
    tpu.vector_store %arg7[%c0_91, %c0_92], %206 {strides = array<i32>} : memref<16x384xf32, #tpu.memory_space<vmem>>, vector<16x384xf32>,
    return
  }
  func.func @transform_0(%arg0: i32) -> (i32, i32) {
    %c0_i32 = arith.constant 0 : i32
    %c0_i32_0 = arith.constant 0 : i32
    %c0_i32_1 = arith.constant 0 : i32
    return %c0_i32, %c0_i32_0 : i32, i32
  }
  func.func @transform_1(%arg0: i32) -> (i32, i32) {
    %c0_i32 = arith.constant 0 : i32
    %c0_i32_0 = arith.constant 0 : i32
    %c0_i32_1 = arith.constant 0 : i32
    return %c0_i32, %c0_i32_0 : i32, i32
  }
  func.func @transform_2(%arg0: i32) -> (i32, i32) {
    %c0_i32 = arith.constant 0 : i32
    %c0_i32_0 = arith.constant 0 : i32
    %c0_i32_1 = arith.constant 0 : i32
    return %c0_i32, %c0_i32_0 : i32, i32
  }
  func.func @transform_3(%arg0: i32) -> (i32, i32) {
    %c0_i32 = arith.constant 0 : i32
    %c0_i32_0 = arith.constant 0 : i32
    %c0_i32_1 = arith.constant 0 : i32
    return %c0_i32, %c0_i32_0 : i32, i32
  }
  func.func @transform_4(%arg0: i32) -> (i32, i32) {
    %c0_i32 = arith.constant 0 : i32
    %c0_i32_0 = arith.constant 0 : i32
    %c0_i32_1 = arith.constant 0 : i32
    return %c0_i32, %c0_i32_0 : i32, i32
  }
  func.func @transform_5(%arg0: i32) -> (i32, i32) {
    %c0_i32 = arith.constant 0 : i32
    %c0_i32_0 = arith.constant 0 : i32
    %c0_i32_1 = arith.constant 0 : i32
    return %c0_i32, %c0_i32_0 : i32, i32
  }
  func.func @transform_6(%arg0: i32) -> (i32, i32) {
    %c0_i32 = arith.constant 0 : i32
    %c0_i32_0 = arith.constant 0 : i32
    %c0_i32_1 = arith.constant 0 : i32
    return %c0_i32, %c0_i32_0 : i32, i32
  }
}

</mosaic_0001>

<llo_original>
// kernel: mul.310
$region0: #{mul.310}
  #allocation0 [shape = 's32[1]{0}', space=sflag, size = 0x4, scoped, tag = 'scoped memory for mul.310']
  %s0 = inlined_call_operand.vmem [shape: f32[8], index: 0, kind: input, shape index: {}]
  %s1 = inlined_call_operand.vmem [shape: f32[16,8], index: 1, kind: output, shape index: {}]
  // Predicated region
  $region2: #{mul.310} parent=0 // pred_check
    _
  $region3: #{mul.310} parent=0 // pred_check_branch
    %3 = sbr.rel (0) target = $region5
  $region4: #{mul.310} parent=0 // pred_region
    _
  $region5: #{mul.310} parent=0 // pred_fallthru
    _
  %v4 = vld [vmem:[%s0] ss:$0 sm:$0xff]
  %5 = vst [vmem:[%s1] sm:$0xff] %v4
  %s6 = scalar_lea.vmem %s1, 8
  %7 = vst [vmem:[%s6] sm:$0xff] %v4

// kernel: mul.471
$region0: #{mul.471}
  #allocation2 [shape = 's32[1]{0}', space=sflag, size = 0x4, scoped, tag = 'scoped memory for mul.471']
  %s0 = inlined_call_operand.hbm [shape: f32[8], index: 0, kind: input, shape index: {}]
  %s1 = inlined_call_operand.vmem [shape: f32[16,8], index: 1, kind: output, shape index: {}]
  $region1: #{mul.471} parent=0
    #allocation0 [shape = 'u8[512]{0}', space=vmem, size = 0x400, scoped, tag = 'operand span for operand 0']
    #allocation1 [shape = 's32[1]{0}', space=sflag, size = 0x4, scoped, tag = 'scoped memory for mul.471']
    %2 = vsyncpa [#allocation1], 0
    // Predicated region
    $region2: #{mul.471} parent=1 // pred_check
      _
    $region3: #{mul.471} parent=1 // pred_check_branch
      %4 = sbr.rel (0) target = $region5
    $region4: #{mul.471} parent=1 // pred_region
      %6 = vsyncadd [#allocation1], 0
      %s8 = sshll.u32 %s0, 4
      %s9 = int_to_ptr.hbm [resolvable:$true] %s8
      %s10 = sshll.u32 [#allocation0], 4
      %s11 = int_to_ptr.vmem [resolvable:$true] %s10
      %13 = dma.hbm_to_vmem [thread:$0]  %s9, 16, %s11, [#allocation1]
    $region5: #{mul.471} parent=1 // pred_fallthru
      _
    // Predicated region
    $region6: #{mul.471} parent=1 // pred_check
      _
    $region7: #{mul.471} parent=1 // pred_check_branch
      %15 = sbr.rel (0) target = $region9
    $region8: #{mul.471} parent=1 // pred_region
      %17 = dma.done [#allocation1], 16
    $region9: #{mul.471} parent=1 // pred_fallthru
      _
    %v18 = vld [vmem:[#allocation0] ss:$0 sm:$0xff]
    %19 = vst [vmem:[%s1] sm:$0xff] %v18
    %s20 = scalar_lea.vmem %s1, 8
    %21 = vst [vmem:[%s20] sm:$0xff] %v18
    %22 = vsyncpa [#allocation1], 1

// kernel: tile.164
$region0: #{tile.164}
  #allocation0 [shape = 's32[1]{0}', space=sflag, size = 0x4, scoped, tag = 'scoped memory for tile.164']
  %s0 = inlined_call_operand.vmem [shape: f32[12], index: 0, kind: input, shape index: {}]
  %s1 = inlined_call_operand.vmem [shape: f32[32,12], index: 1, kind: output, shape index: {}]
  // Predicated region
  $region2: #{tile.164} parent=0 // pred_check
    _
  $region3: #{tile.164} parent=0 // pred_check_branch
    %3 = sbr.rel (0) target = $region5
  $region4: #{tile.164} parent=0 // pred_region
    _
  $region5: #{tile.164} parent=0 // pred_fallthru
    _
  %v4 = vld [vmem:[%s0] ss:$0 sm:$0xff]
  %5 = vst [vmem:[%s1] sm:$0xff] %v4
  %s6 = scalar_lea.vmem %s1, 8
  %7 = vst [vmem:[%s6] sm:$0xff] %v4
  %s8 = scalar_lea.vmem %s1, 16
  %9 = vst [vmem:[%s8] sm:$0xff] %v4
  %s10 = scalar_lea.vmem %s1, 24
  %11 = vst [vmem:[%s10] sm:$0xff] %v4

// kernel: tile.165
$region0: #{tile.165}
  %s0 = inlined_call_operand.vmem [shape: f32[32,12], index: 0, kind: input, shape index: {}]
  %s1 = inlined_call_operand.vmem [shape: f32[1,384], index: 1, kind: output, shape index: {}]
  $region1: #{tile.165} parent=0
    #allocation0 [shape = 'u8[12288]{0}', space=vmem, size = 0x3000, scoped, tag = 'scoped mem for output reshape']
    %v2 = vld [vmem:[%s0] sm:$0x1]
    %vm3 = vcmask 97280
    %4 = vst.msk [vmem:[#allocation0] sm:$0x1] %vm3, %v2
    %s5 = scalar_lea.vmem %s0, 21
    %v6 = vld [vmem:[%s5] sm:$0x1]
    %s7 = scalar_lea.vmem %s0, 21
    %v8 = vld [vmem:[%s7] sm:$0x1]
    %vm9 = vcmask 31744
    %v10 = vsel %vm9, %v8, %v6
    %11 = vrot.lane.b32.xlu0 %v10, 124
    %v12 = vpop.permute.xlu0 %11
    %vm13 = vcmask 64512
    %s14 = scalar_lea.vmem [#allocation0], 16
    %15 = vst.msk [vmem:[%s14] sm:$0x1] %vm13, %v12
    %vm16 = vcmask 1048544
    %s17 = scalar_lea.vmem [#allocation0], 8
    %18 = vst.msk [vmem:[%s17] sm:$0x1] %vm16, %v12
    %s19 = scalar_lea.vmem %s0, 10
    %v20 = vld [vmem:[%s19] sm:$0x1]
    %s21 = scalar_lea.vmem %s0, 10
    %v22 = vld [vmem:[%s21] sm:$0x1]
    %vm23 = vcmask 64512
    %v24 = vsel %vm23, %v22, %v20
    %25 = vrot.lane.b32.xlu0 %v24, 120
    %v26 = vpop.permute.xlu0 %25
    %vm27 = vcmask 31744
    %s28 = scalar_lea.vmem [#allocation0], 8
    %29 = vst.msk [vmem:[%s28] sm:$0x1] %vm27, %v26
    %vm30 = vcmask 1048512
    %31 = vst.msk [vmem:[#allocation0] sm:$0x1] %vm30, %v26
    %s32 = scalar_lea.vmem %s0, 31
    %v33 = vld [vmem:[%s32] sm:$0x1]
    %34 = vrot.lane.b32.xlu0 %v33, 116
    %v35 = vpop.permute.xlu0 %34
    %vm36 = vcmask 1048480
    %s37 = scalar_lea.vmem [#allocation0], 16
    %38 = vst.msk [vmem:[%s37] sm:$0x1] %vm36, %v35
    %s39 = scalar_lea.vmem %s0, 20
    %v40 = vld [vmem:[%s39] sm:$0x1]
    %41 = vrot.lane.b32.xlu0 %v40, 112
    %v42 = vpop.permute.xlu0 %41
    %vm43 = vcmask 1015680
    %s44 = scalar_lea.vmem [#allocation0], 8
    %45 = vst.msk [vmem:[%s44] sm:$0x1] %vm43, %v42
    %s46 = scalar_lea.vmem %s0, 9
    %v47 = vld [vmem:[%s46] sm:$0x1]
    %48 = vrot.lane.b32.xlu0 %v47, 108
    %v49 = vpop.permute.xlu0 %48
    %vm50 = vcmask 982880
    %51 = vst.msk [vmem:[#allocation0] sm:$0x1] %vm50, %v49
    %s52 = scalar_lea.vmem %s0, 30
    %v53 = vld [vmem:[%s52] sm:$0x1]
    %54 = vrot.lane.b32.xlu0 %v53, 104
    %v55 = vpop.permute.xlu0 %54
    %vm56 = vcmask 950080
    %s57 = scalar_lea.vmem [#allocation0], 16
    %58 = vst.msk [vmem:[%s57] sm:$0x1] %vm56, %v55
    %s59 = scalar_lea.vmem %s0, 19
    %v60 = vld [vmem:[%s59] sm:$0x1]
    %61 = vrot.lane.b32.xlu0 %v60, 100
    %v62 = vpop.permute.xlu0 %61
    %vm63 = vcmask 917280
    %s64 = scalar_lea.vmem [#allocation0], 8
    %65 = vst.msk [vmem:[%s64] sm:$0x1] %vm63, %v62
    %s66 = scalar_lea.vmem %s0, 8
    %v67 = vld [vmem:[%s66] sm:$0x1]
    %68 = vrot.lane.b32.xlu0 %v67, 96
    %v69 = vpop.permute.xlu0 %68
    %vm70 = vcmask 884480
    %71 = vst.msk [vmem:[#allocation0] sm:$0x1] %vm70, %v69
    %s72 = scalar_lea.vmem %s0, 29
    %v73 = vld [vmem:[%s72] sm:$0x1]
    %74 = vrot.lane.b32.xlu0 %v73, 92
    %v75 = vpop.permute.xlu0 %74
    %vm76 = vcmask 851680
    %s77 = scalar_lea.vmem [#allocation0], 16
    %78 = vst.msk [vmem:[%s77] sm:$0x1] %vm76, %v75
    %s79 = scalar_lea.vmem %s0, 18
    %v80 = vld [vmem:[%s79] sm:$0x1]
    %81 = vrot.lane.b32.xlu0 %v80, 88
    %v82 = vpop.permute.xlu0 %81
    %vm83 = vcmask 818880
    %s84 = scalar_lea.vmem [#allocation0], 8
    %85 = vst.msk [vmem:[%s84] sm:$0x1] %vm83, %v82
    %s86 = scalar_lea.vmem %s0, 7
    %v87 = vld [vmem:[%s86] sm:$0x1]
    %88 = vrot.lane.b32.xlu0 %v87, 84
    %v89 = vpop.permute.xlu0 %88
    %vm90 = vcmask 786080
    %91 = vst.msk [vmem:[#allocation0] sm:$0x1] %vm90, %v89
    %s92 = scalar_lea.vmem %s0, 28
    %v93 = vld [vmem:[%s92] sm:$0x1]
    %94 = vrot.lane.b32.xlu0 %v93, 80
    %v95 = vpop.permute.xlu0 %94
    %vm96 = vcmask 753280
    %s97 = scalar_lea.vmem [#allocation0], 16
    %98 = vst.msk [vmem:[%s97] sm:$0x1] %vm96, %v95
    %s99 = scalar_lea.vmem %s0, 17
    %v100 = vld [vmem:[%s99] sm:$0x1]
    %101 = vrot.lane.b32.xlu0 %v100, 76
    %v102 = vpop.permute.xlu0 %101
    %vm103 = vcmask 720480
    %s104 = scalar_lea.vmem [#allocation0], 8
    %105 = vst.msk [vmem:[%s104] sm:$0x1] %vm103, %v102
    %s106 = scalar_lea.vmem %s0, 6
    %v107 = vld [vmem:[%s106] sm:$0x1]
    %108 = vrot.lane.b32.xlu0 %v107, 72
    %v109 = vpop.permute.xlu0 %108
    %vm110 = vcmask 687680
    %111 = vst.msk [vmem:[#allocation0] sm:$0x1] %vm110, %v109
    %s112 = scalar_lea.vmem %s0, 27
    %v113 = vld [vmem:[%s112] sm:$0x1]
    %114 = vrot.lane.b32.xlu0 %v113, 68
    %v115 = vpop.permute.xlu0 %114
    %vm116 = vcmask 654880
    %s117 = scalar_lea.vmem [#allocation0], 16
    %118 = vst.msk [vmem:[%s117] sm:$0x1] %vm116, %v115
    %s119 = scalar_lea.vmem %s0, 16
    %v120 = vld [vmem:[%s119] sm:$0x1]
    %121 = vrot.lane.b32.xlu0 %v120, 64
    %v122 = vpop.permute.xlu0 %121
    %vm123 = vcmask 622080
    %s124 = scalar_lea.vmem [#allocation0], 8
    %125 = vst.msk [vmem:[%s124] sm:$0x1] %vm123, %v122
    %s126 = scalar_lea.vmem %s0, 5
    %v127 = vld [vmem:[%s126] sm:$0x1]
    %128 = vrot.lane.b32.xlu0 %v127, 60
    %v129 = vpop.permute.xlu0 %128
    %vm130 = vcmask 589280
    %131 = vst.msk [vmem:[#allocation0] sm:$0x1] %vm130, %v129
    %s132 = scalar_lea.vmem %s0, 26
    %v133 = vld [vmem:[%s132] sm:$0x1]
    %134 = vrot.lane.b32.xlu0 %v133, 56
    %v135 = vpop.permute.xlu0 %134
    %vm136 = vcmask 556480
    %s137 = scalar_lea.vmem [#allocation0], 16
    %138 = vst.msk [vmem:[%s137] sm:$0x1] %vm136, %v135
    %s139 = scalar_lea.vmem %s0, 15
    %v140 = vld [vmem:[%s139] sm:$0x1]
    %141 = vrot.lane.b32.xlu0 %v140, 52
    %v142 = vpop.permute.xlu0 %141
    %vm143 = vcmask 523680
    %s144 = scalar_lea.vmem [#allocation0], 8
    %145 = vst.msk [vmem:[%s144] sm:$0x1] %vm143, %v142
    %s146 = scalar_lea.vmem %s0, 4
    %v147 = vld [vmem:[%s146] sm:$0x1]
    %148 = vrot.lane.b32.xlu0 %v147, 48
    %v149 = vpop.permute.xlu0 %148
    %vm150 = vcmask 490880
    %151 = vst.msk [vmem:[#allocation0] sm:$0x1] %vm150, %v149
    %s152 = scalar_lea.vmem %s0, 25
    %v153 = vld [vmem:[%s152] sm:$0x1]
    %154 = vrot.lane.b32.xlu0 %v153, 44
    %v155 = vpop.permute.xlu0 %154
    %vm156 = vcmask 458080
    %s157 = scalar_lea.vmem [#allocation0], 16
    %158 = vst.msk [vmem:[%s157] sm:$0x1] %vm156, %v155
    %s159 = scalar_lea.vmem %s0, 14
    %v160 = vld [vmem:[%s159] sm:$0x1]
    %161 = vrot.lane.b32.xlu0 %v160, 40
    %v162 = vpop.permute.xlu0 %161
    %vm163 = vcmask 425280
    %s164 = scalar_lea.vmem [#allocation0], 8
    %165 = vst.msk [vmem:[%s164] sm:$0x1] %vm163, %v162
    %s166 = scalar_lea.vmem %s0, 3
    %v167 = vld [vmem:[%s166] sm:$0x1]
    %168 = vrot.lane.b32.xlu0 %v167, 36
    %v169 = vpop.permute.xlu0 %168
    %vm170 = vcmask 392480
    %171 = vst.msk [vmem:[#allocation0] sm:$0x1] %vm170, %v169
    %s172 = scalar_lea.vmem %s0, 24
    %v173 = vld [vmem:[%s172] sm:$0x1]
    %174 = vrot.lane.b32.xlu0 %v173, 32
    %v175 = vpop.permute.xlu0 %174
    %vm176 = vcmask 359680
    %s177 = scalar_lea.vmem [#allocation0], 16
    %178 = vst.msk [vmem:[%s177] sm:$0x1] %vm176, %v175
    %s179 = scalar_lea.vmem %s0, 13
    %v180 = vld [vmem:[%s179] sm:$0x1]
    %181 = vrot.lane.b32.xlu0 %v180, 28
    %v182 = vpop.permute.xlu0 %181
    %vm183 = vcmask 326880
    %s184 = scalar_lea.vmem [#allocation0], 8
    %185 = vst.msk [vmem:[%s184] sm:$0x1] %vm183, %v182
    %s186 = scalar_lea.vmem %s0, 2
    %v187 = vld [vmem:[%s186] sm:$0x1]
    %188 = vrot.lane.b32.xlu0 %v187, 24
    %v189 = vpop.permute.xlu0 %188
    %vm190 = vcmask 294080
    %191 = vst.msk [vmem:[#allocation0] sm:$0x1] %vm190, %v189
    %s192 = scalar_lea.vmem %s0, 23
    %v193 = vld [vmem:[%s192] sm:$0x1]
    %194 = vrot.lane.b32.xlu0 %v193, 20
    %v195 = vpop.permute.xlu0 %194
    %vm196 = vcmask 261280
    %s197 = scalar_lea.vmem [#allocation0], 16
    %198 = vst.msk [vmem:[%s197] sm:$0x1] %vm196, %v195
    %s199 = scalar_lea.vmem %s0, 12
    %v200 = vld [vmem:[%s199] sm:$0x1]
    %201 = vrot.lane.b32.xlu0 %v200, 16
    %v202 = vpop.permute.xlu0 %201
    %vm203 = vcmask 228480
    %s204 = scalar_lea.vmem [#allocation0], 8
    %205 = vst.msk [vmem:[%s204] sm:$0x1] %vm203, %v202
    %s206 = scalar_lea.vmem %s0, 1
    %v207 = vld [vmem:[%s206] sm:$0x1]
    %208 = vrot.lane.b32.xlu0 %v207, 12
    %v209 = vpop.permute.xlu0 %208
    %vm210 = vcmask 195680
    %211 = vst.msk [vmem:[#allocation0] sm:$0x1] %vm210, %v209
    %s212 = scalar_lea.vmem %s0, 22
    %v213 = vld [vmem:[%s212] sm:$0x1]
    %214 = vrot.lane.b32.xlu0 %v213, 8
    %v215 = vpop.permute.xlu0 %214
    %vm216 = vcmask 162880
    %s217 = scalar_lea.vmem [#allocation0], 16
    %218 = vst.msk [vmem:[%s217] sm:$0x1] %vm216, %v215
    %s219 = scalar_lea.vmem %s0, 11
    %v220 = vld [vmem:[%s219] sm:$0x1]
    %221 = vrot.lane.b32.xlu0 %v220, 4
    %v222 = vpop.permute.xlu0 %221
    %vm223 = vcmask 130080
    %s224 = scalar_lea.vmem [#allocation0], 8
    %225 = vst.msk [vmem:[%s224] sm:$0x1] %vm223, %v222
    %s227 = ssub.s32 2, 1
    %v228 = vld [vmem:[#allocation0] sm:%s227]
    %s230 = ssub.s32 2, 1
    %231 = vst [vmem:[%s1] sm:%s230] %v228
    %s232 = scalar_lea.vmem [#allocation0], 8
    %v233 = vld [vmem:[%s232] sm:%s227]
    %s235 = ssub.s32 2, 1
    %s236 = scalar_lea.vmem %s1, 1
    %237 = vst [vmem:[%s236] sm:%s235] %v233
    %s238 = scalar_lea.vmem [#allocation0], 16
    %v239 = vld [vmem:[%s238] sm:%s227]
    %s241 = ssub.s32 2, 1
    %s242 = scalar_lea.vmem %s1, 2
    %243 = vst [vmem:[%s242] sm:%s241] %v239

// kernel: mscb_pallas.1
$region0: #{mscb_pallas.1}
  #allocation0 [shape = 'u32[]', space=smem, size = 0x4, offset = 0x4, fixed_abs, tag = 'smem constant byte address 0x4 - core index']
  #allocation1 [shape = 'u32[72,128]{1,0:T(1,128)}', space=vmem, size = 0x9000, scoped, tag = 'internal scratch']
  #allocation2 [shape = 'f32[20,256]{1,0:T(8,128)}', space=vmem, size = 0x6000, scoped, tag = 'scratch operand']
  %s0 = inlined_call_operand.vmem [shape: f32[16,128], index: 0, kind: input, shape index: {}]
  %s1 = inlined_call_operand.vmem [shape: f32[128,256], index: 1, kind: input, shape index: {}]
  %s2 = inlined_call_operand.vmem [shape: f32[39,256], index: 2, kind: input, shape index: {}]
  %s3 = inlined_call_operand.vmem [shape: f32[256,384], index: 3, kind: input, shape index: {}]
  %s4 = inlined_call_operand.vmem [shape: f32[128,384], index: 4, kind: input, shape index: {}]
  %s5 = inlined_call_operand.vmem [shape: f32[1,384], index: 5, kind: input, shape index: {}]
  %s6 = inlined_call_operand.vmem [shape: f32[16,384], index: 6, kind: output, shape index: {}]
  %s7 = sld [smem:[#allocation0]]
  $region34: #{mscb_pallas.1} parent=0
    _
  %s9 = ssub.s32 1, %s7
  %s10 = scalar_select 0, %s9, %s7
  // Predicated region
  $region2: #{mscb_pallas.1} parent=0 // pred_check
    _
  $region3: #{mscb_pallas.1} parent=0 // pred_check_branch
    %12 = sbr.rel (0) target = $region5
  $region4: #{mscb_pallas.1} parent=0 // pred_region
    _
  $region5: #{mscb_pallas.1} parent=0 // pred_fallthru
    _
  // Predicated region
  $region6: #{mscb_pallas.1} parent=0 // pred_check
    _
  $region7: #{mscb_pallas.1} parent=0 // pred_check_branch
    %14 = sbr.rel (0) target = $region9
  $region8: #{mscb_pallas.1} parent=0 // pred_region
    _
  $region9: #{mscb_pallas.1} parent=0 // pred_fallthru
    _
  // Predicated region
  $region10: #{mscb_pallas.1} parent=0 // pred_check
    _
  $region11: #{mscb_pallas.1} parent=0 // pred_check_branch
    %16 = sbr.rel (0) target = $region13
  $region12: #{mscb_pallas.1} parent=0 // pred_region
    _
  $region13: #{mscb_pallas.1} parent=0 // pred_fallthru
    _
  // Predicated region
  $region14: #{mscb_pallas.1} parent=0 // pred_check
    _
  $region15: #{mscb_pallas.1} parent=0 // pred_check_branch
    %18 = sbr.rel (0) target = $region17
  $region16: #{mscb_pallas.1} parent=0 // pred_region
    _
  $region17: #{mscb_pallas.1} parent=0 // pred_fallthru
    _
  // Predicated region
  $region18: #{mscb_pallas.1} parent=0 // pred_check
    _
  $region19: #{mscb_pallas.1} parent=0 // pred_check_branch
    %20 = sbr.rel (0) target = $region21
  $region20: #{mscb_pallas.1} parent=0 // pred_region
    _
  $region21: #{mscb_pallas.1} parent=0 // pred_fallthru
    _
  // Predicated region
  $region22: #{mscb_pallas.1} parent=0 // pred_check
    _
  $region23: #{mscb_pallas.1} parent=0 // pred_check_branch
    %22 = sbr.rel (0) target = $region25
  $region24: #{mscb_pallas.1} parent=0 // pred_region
    _
  $region25: #{mscb_pallas.1} parent=0 // pred_fallthru
    _
  %v23 = vld [vmem:[%s0] sm:$0xff]
  %v24 = vld [vmem:[%s0 + $0x8] sm:$0xff]
  %v25 = vld [vmem:[%s1] sm:$0xff]
  %v26 = vld [vmem:[%s1 + $0x8] sm:$0xff]
  %v27 = vld [vmem:[%s1 + $0x10] sm:$0xff]
  %v28 = vld [vmem:[%s1 + $0x18] sm:$0xff]
  %v29 = vld [vmem:[%s1 + $0x20] sm:$0xff]
  %v30 = vld [vmem:[%s1 + $0x28] sm:$0xff]
  %v31 = vld [vmem:[%s1 + $0x30] sm:$0xff]
  %v32 = vld [vmem:[%s1 + $0x38] sm:$0xff]
  %v33 = vld [vmem:[%s1 + $0x40] sm:$0xff]
  %v34 = vld [vmem:[%s1 + $0x48] sm:$0xff]
  %v35 = vld [vmem:[%s1 + $0x50] sm:$0xff]
  %v36 = vld [vmem:[%s1 + $0x58] sm:$0xff]
  %v37 = vld [vmem:[%s1 + $0x60] sm:$0xff]
  %v38 = vld [vmem:[%s1 + $0x68] sm:$0xff]
  %v39 = vld [vmem:[%s1 + $0x70] sm:$0xff]
  %v40 = vld [vmem:[%s1 + $0x78] sm:$0xff]
  %v41 = vld [vmem:[%s1 + $0x80] sm:$0xff]
  %v42 = vld [vmem:[%s1 + $0x88] sm:$0xff]
  %v43 = vld [vmem:[%s1 + $0x90] sm:$0xff]
  %v44 = vld [vmem:[%s1 + $0x98] sm:$0xff]
  %v45 = vld [vmem:[%s1 + $0xa0] sm:$0xff]
  %v46 = vld [vmem:[%s1 + $0xa8] sm:$0xff]
  %v47 = vld [vmem:[%s1 + $0xb0] sm:$0xff]
  %v48 = vld [vmem:[%s1 + $0xb8] sm:$0xff]
  %v49 = vld [vmem:[%s1 + $0xc0] sm:$0xff]
  %v50 = vld [vmem:[%s1 + $0xc8] sm:$0xff]
  %v51 = vld [vmem:[%s1 + $0xd0] sm:$0xff]
  %v52 = vld [vmem:[%s1 + $0xd8] sm:$0xff]
  %v53 = vld [vmem:[%s1 + $0xe0] sm:$0xff]
  %v54 = vld [vmem:[%s1 + $0xe8] sm:$0xff]
  %v55 = vld [vmem:[%s1 + $0xf0] sm:$0xff]
  %v56 = vld [vmem:[%s1 + $0xf8] sm:$0xff]
  %s57 = scalar_lea.vmem %s2, 70
  %v58 = vld [vmem:[%s57] ss:$8 sm:$0x3]
  %v60 = vperm.slane %v58, 0
  %v61 = vperm.slane %v58, 1
  %64 = vmatpush.msra.mxu0 %v55
  %65 = vmatpush.msra.mxu0 %v53
  %66 = vmatpush.msra.mxu0 %v51
  %67 = vmatpush.msra.mxu0 %v49
  %68 = vmatpush.msra.mxu0 %v47
  %69 = vmatpush.msra.mxu0 %v45
  %70 = vmatpush.msra.mxu0 %v43
  %71 = vmatpush.msra.mxu0 %v41
  %72 = vmatpush.msra.mxu0 %v39
  %73 = vmatpush.msra.mxu0 %v37
  %74 = vmatpush.msra.mxu0 %v35
  %75 = vmatpush.msra.mxu0 %v33
  %76 = vmatpush.msra.mxu0 %v31
  %77 = vmatpush.msra.mxu0 %v29
  %78 = vmatpush.msra.mxu0 %v27
  %79 = vmatpush.msra.mxu0 %v25
  %80 = vmatmul.f32.gmra.mxu0 %v23
  %v81 = vpop.f32.mrf.mxu0
  %v82 = vadd.f32 %v60, %v81
  %83 = vmatmul.f32.gmra.mxu0 %v24
  %v84 = vpop.f32.mrf.mxu0
  %v85 = vadd.f32 %v60, %v84
  %86 = vdwg.mxu0
  %87 = vmatpush.msra.mxu0 %v56
  %88 = vmatpush.msra.mxu0 %v54
  %89 = vmatpush.msra.mxu0 %v52
  %90 = vmatpush.msra.mxu0 %v50
  %91 = vmatpush.msra.mxu0 %v48
  %92 = vmatpush.msra.mxu0 %v46
  %93 = vmatpush.msra.mxu0 %v44
  %94 = vmatpush.msra.mxu0 %v42
  %95 = vmatpush.msra.mxu0 %v40
  %96 = vmatpush.msra.mxu0 %v38
  %97 = vmatpush.msra.mxu0 %v36
  %98 = vmatpush.msra.mxu0 %v34
  %99 = vmatpush.msra.mxu0 %v32
  %100 = vmatpush.msra.mxu0 %v30
  %101 = vmatpush.msra.mxu0 %v28
  %102 = vmatpush.msra.mxu0 %v26
  %103 = vmatmul.f32.gmra.mxu0 %v23
  %v104 = vpop.f32.mrf.mxu0
  %v105 = vadd.f32 %v61, %v104
  %106 = vmatmul.f32.gmra.mxu0 %v24
  %v107 = vpop.f32.mrf.mxu0
  %v108 = vadd.f32 %v61, %v107
  %109 = vdwg.mxu0
  %v110 = vmax.f32 %v82, 0.0
  %v111 = vmax.f32 %v105, 0.0
  %v112 = vmax.f32 %v85, 0.0
  %v113 = vmax.f32 %v108, 0.0
  %v114 = vmin.f32 %v110, 6.0
  %v115 = vmin.f32 %v111, 6.0
  %v116 = vmin.f32 %v112, 6.0
  %v117 = vmin.f32 %v113, 6.0
  %118 = vst [vmem:[#allocation2] sm:$0x3] 0.0
  %119 = vst [vmem:[#allocation2 + $0x8] sm:$0x3] 0.0
  %120 = vst [vmem:[#allocation2 + $0x20] sm:$0xc] 0.0
  %121 = vst [vmem:[#allocation2 + $0x28] sm:$0xc] 0.0
  %vm126 = vcmask 1041408
  %v127 = vrot.slane %v114, 6
  %v128 = vrot.slane %v115, 6
  %v129 = vrot.slane %v116, 6
  %v130 = vsel %vm126, %v127, %v129
  %v131 = vrot.slane %v117, 6
  %v132 = vsel %vm126, %v128, %v131
  %139 = vst [vmem:[#allocation2] sm:$0xfc] %v127
  %140 = vst [vmem:[#allocation2 + $0x8] sm:$0xfc] %v128
  %141 = vst [vmem:[#allocation2 + $0x10] sm:$0xff] %v130
  %142 = vst [vmem:[#allocation2 + $0x18] sm:$0xff] %v132
  %143 = vst [vmem:[#allocation2 + $0x20] sm:$0x3] %v129
  %144 = vst [vmem:[#allocation2 + $0x28] sm:$0x3] %v131
  %s145 = scalar_lea.vmem %s2, 66
  %v146 = vld [vmem:[%s145] ss:$8 sm:$0x3]
  %v148 = vperm.slane %v146, 0
  %v149 = vperm.slane %v146, 1
  %v152 = vmul.f32 %v114, %v148
  %v153 = vmul.f32 %v115, %v149
  %v154 = vmul.f32 %v116, %v148
  %v155 = vmul.f32 %v117, %v149
  %v156 = vld [vmem:[#allocation2] sm:$0xff]
  %v157 = vld [vmem:[#allocation2 + $0x8] sm:$0xff]
  %v158 = vld [vmem:[#allocation2 + $0x10] sm:$0xff]
  %v159 = vld [vmem:[#allocation2 + $0x18] sm:$0xff]
  %160 = vrot.lane.b32.xlu0 %v156, 16
  %v161 = vpop.permute.xlu0 %160
  %162 = vrot.lane.b32.xlu0 %v158, 16
  %v163 = vpop.permute.xlu0 %162
  %164 = vrot.lane.b32.xlu0 %v157, 16
  %v165 = vpop.permute.xlu0 %164
  %166 = vrot.lane.b32.xlu0 %v159, 16
  %v167 = vpop.permute.xlu0 %166
  %v168 = vlaneseq
  %v169 = vand.u32 %v168, 127
  %vm170 = vcmp.lt.s32.totalorder %v169, 16
  %v171 = vsel %vm170, %v161, %v165
  %v172 = vsel %vm170, %v163, %v167
  %v173 = vsel %vm170, %v165, %v161
  %v174 = vsel %vm170, %v167, %v163
  %v175 = vld [vmem:[%s2] ss:$8 sm:$0x3]
  %v177 = vperm.slane %v175, 0
  %v178 = vperm.slane %v175, 1
  %v181 = vmul.f32 %v173, %v177
  %v182 = vmul.f32 %v171, %v178
  %v183 = vmul.f32 %v174, %v177
  %v184 = vmul.f32 %v172, %v178
  %185 = vrot.lane.b32.xlu0 %v156, 8
  %v186 = vpop.permute.xlu0 %185
  %187 = vrot.lane.b32.xlu0 %v158, 8
  %v188 = vpop.permute.xlu0 %187
  %189 = vrot.lane.b32.xlu0 %v157, 8
  %v190 = vpop.permute.xlu0 %189
  %191 = vrot.lane.b32.xlu0 %v159, 8
  %v192 = vpop.permute.xlu0 %191
  %vm193 = vcmp.lt.s32.totalorder %v169, 8
  %v194 = vsel %vm193, %v186, %v190
  %v195 = vsel %vm193, %v188, %v192
  %v196 = vsel %vm193, %v190, %v186
  %v197 = vsel %vm193, %v192, %v188
  %s198 = scalar_lea.vmem %s2, 1
  %v199 = vld [vmem:[%s198] ss:$8 sm:$0x3]
  %v201 = vperm.slane %v199, 0
  %v202 = vperm.slane %v199, 1
  %v205 = vmul.f32 %v196, %v201
  %v206 = vmul.f32 %v194, %v202
  %v207 = vmul.f32 %v197, %v201
  %v208 = vmul.f32 %v195, %v202
  %v209 = vadd.f32 %v181, %v205
  %v210 = vadd.f32 %v182, %v206
  %v211 = vadd.f32 %v183, %v207
  %v212 = vadd.f32 %v184, %v208
  %s213 = scalar_lea.vmem %s2, 2
  %v214 = vld [vmem:[%s213] ss:$8 sm:$0x3]
  %v216 = vperm.slane %v214, 0
  %v217 = vperm.slane %v214, 1
  %v220 = vmul.f32 %v156, %v216
  %v221 = vmul.f32 %v157, %v217
  %v222 = vmul.f32 %v158, %v216
  %v223 = vmul.f32 %v159, %v217
  %v224 = vadd.f32 %v209, %v220
  %v225 = vadd.f32 %v210, %v221
  %v226 = vadd.f32 %v211, %v222
  %v227 = vadd.f32 %v212, %v223
  %228 = vrot.lane.b32.xlu0 %v156, 120
  %v229 = vpop.permute.xlu0 %228
  %230 = vrot.lane.b32.xlu0 %v158, 120
  %v231 = vpop.permute.xlu0 %230
  %232 = vrot.lane.b32.xlu0 %v157, 120
  %v233 = vpop.permute.xlu0 %232
  %234 = vrot.lane.b32.xlu0 %v159, 120
  %v235 = vpop.permute.xlu0 %234
  %vm236 = vcmp.lt.s32.totalorder %v169, 120
  %v237 = vsel %vm236, %v229, %v233
  %v238 = vsel %vm236, %v231, %v235
  %v239 = vsel %vm236, %v233, %v229
  %v240 = vsel %vm236, %v235, %v231
  %s241 = scalar_lea.vmem %s2, 3
  %v242 = vld [vmem:[%s241] ss:$8 sm:$0x3]
  %v244 = vperm.slane %v242, 0
  %v245 = vperm.slane %v242, 1
  %v248 = vmul.f32 %v237, %v244
  %v249 = vmul.f32 %v239, %v245
  %v250 = vmul.f32 %v238, %v244
  %v251 = vmul.f32 %v240, %v245
  %v252 = vadd.f32 %v224, %v248
  %v253 = vadd.f32 %v225, %v249
  %v254 = vadd.f32 %v226, %v250
  %v255 = vadd.f32 %v227, %v251
  %256 = vrot.lane.b32.xlu0 %v156, 112
  %v257 = vpop.permute.xlu0 %256
  %258 = vrot.lane.b32.xlu0 %v158, 112
  %v259 = vpop.permute.xlu0 %258
  %260 = vrot.lane.b32.xlu0 %v157, 112
  %v261 = vpop.permute.xlu0 %260
  %262 = vrot.lane.b32.xlu0 %v159, 112
  %v263 = vpop.permute.xlu0 %262
  %vm264 = vcmp.lt.s32.totalorder %v169, 112
  %v265 = vsel %vm264, %v257, %v261
  %v266 = vsel %vm264, %v259, %v263
  %v267 = vsel %vm264, %v261, %v257
  %v268 = vsel %vm264, %v263, %v259
  %s269 = scalar_lea.vmem %s2, 4
  %v270 = vld [vmem:[%s269] ss:$8 sm:$0x3]
  %v272 = vperm.slane %v270, 0
  %v273 = vperm.slane %v270, 1
  %v276 = vmul.f32 %v265, %v272
  %v277 = vmul.f32 %v267, %v273
  %v278 = vmul.f32 %v266, %v272
  %v279 = vmul.f32 %v268, %v273
  %v280 = vadd.f32 %v252, %v276
  %v281 = vadd.f32 %v253, %v277
  %v282 = vadd.f32 %v254, %v278
  %v283 = vadd.f32 %v255, %v279
  %v284 = vld [vmem:[#allocation2] sm:$0xfe]
  %v285 = vld [vmem:[#allocation2 + $0x8] sm:$0xfe]
  %v286 = vld [vmem:[#allocation2 + $0x10] sm:$0xff]
  %v287 = vld [vmem:[#allocation2 + $0x18] sm:$0xff]
  %v288 = vld [vmem:[#allocation2 + $0x20] sm:$0x1]
  %v289 = vld [vmem:[#allocation2 + $0x28] sm:$0x1]
  %vm296 = vcmask 1046528
  %v297 = vrot.slane %v284, 1
  %v298 = vrot.slane %v286, 1
  %v299 = vsel %vm296, %v297, %v298
  %v300 = vrot.slane %v285, 1
  %v301 = vrot.slane %v287, 1
  %v302 = vsel %vm296, %v300, %v301
  %v303 = vrot.slane %v288, 1
  %v304 = vsel %vm296, %v298, %v303
  %v305 = vrot.slane %v289, 1
  %v306 = vsel %vm296, %v301, %v305
  %311 = vrot.lane.b32.xlu0 %v299, 16
  %v312 = vpop.permute.xlu0 %311
  %313 = vrot.lane.b32.xlu0 %v304, 16
  %v314 = vpop.permute.xlu0 %313
  %315 = vrot.lane.b32.xlu0 %v302, 16
  %v316 = vpop.permute.xlu0 %315
  %317 = vrot.lane.b32.xlu0 %v306, 16
  %v318 = vpop.permute.xlu0 %317
  %v319 = vsel %vm170, %v312, %v316
  %v320 = vsel %vm170, %v314, %v318
  %v321 = vsel %vm170, %v316, %v312
  %v322 = vsel %vm170, %v318, %v314
  %s323 = scalar_lea.vmem %s2, 5
  %v324 = vld [vmem:[%s323] ss:$8 sm:$0x3]
  %v326 = vperm.slane %v324, 0
  %v327 = vperm.slane %v324, 1
  %v330 = vmul.f32 %v321, %v326
  %v331 = vmul.f32 %v319, %v327
  %v332 = vmul.f32 %v322, %v326
  %v333 = vmul.f32 %v320, %v327
  %v334 = vadd.f32 %v280, %v330
  %v335 = vadd.f32 %v281, %v331
  %v336 = vadd.f32 %v282, %v332
  %v337 = vadd.f32 %v283, %v333
  %338 = vrot.lane.b32.xlu0 %v299, 8
  %v339 = vpop.permute.xlu0 %338
  %340 = vrot.lane.b32.xlu0 %v304, 8
  %v341 = vpop.permute.xlu0 %340
  %342 = vrot.lane.b32.xlu0 %v302, 8
  %v343 = vpop.permute.xlu0 %342
  %344 = vrot.lane.b32.xlu0 %v306, 8
  %v345 = vpop.permute.xlu0 %344
  %v346 = vsel %vm193, %v339, %v343
  %v347 = vsel %vm193, %v341, %v345
  %v348 = vsel %vm193, %v343, %v339
  %v349 = vsel %vm193, %v345, %v341
  %s350 = scalar_lea.vmem %s2, 6
  %v351 = vld [vmem:[%s350] ss:$8 sm:$0x3]
  %v353 = vperm.slane %v351, 0
  %v354 = vperm.slane %v351, 1
  %v357 = vmul.f32 %v348, %v353
  %v358 = vmul.f32 %v346, %v354
  %v359 = vmul.f32 %v349, %v353
  %v360 = vmul.f32 %v347, %v354
  %v361 = vadd.f32 %v334, %v357
  %v362 = vadd.f32 %v335, %v358
  %v363 = vadd.f32 %v336, %v359
  %v364 = vadd.f32 %v337, %v360
  %s365 = scalar_lea.vmem %s2, 49
  %v366 = vld [vmem:[%s365] ss:$8 sm:$0x3]
  %v368 = vperm.slane %v366, 0
  %v369 = vperm.slane %v366, 1
  %v372 = vmul.f32 %v348, %v368
  %v373 = vmul.f32 %v346, %v369
  %v374 = vmul.f32 %v349, %v368
  %v375 = vmul.f32 %v347, %v369
  %s376 = scalar_lea.vmem %s2, 7
  %v377 = vld [vmem:[%s376] ss:$8 sm:$0x3]
  %v379 = vperm.slane %v377, 0
  %v380 = vperm.slane %v377, 1
  %v383 = vmul.f32 %v284, %v379
  %v384 = vmul.f32 %v285, %v380
  %v385 = vmul.f32 %v286, %v379
  %v386 = vmul.f32 %v287, %v380
  %v387 = vmul.f32 %v288, %v379
  %v388 = vmul.f32 %v289, %v380
  %v395 = vrot.slane %v383, 1
  %v396 = vrot.slane %v385, 1
  %v397 = vsel %vm296, %v395, %v396
  %v398 = vrot.slane %v384, 1
  %v399 = vrot.slane %v386, 1
  %v400 = vsel %vm296, %v398, %v399
  %v401 = vrot.slane %v387, 1
  %v402 = vsel %vm296, %v396, %v401
  %v403 = vrot.slane %v388, 1
  %v404 = vsel %vm296, %v399, %v403
  %v409 = vadd.f32 %v361, %v397
  %v410 = vadd.f32 %v362, %v400
  %v411 = vadd.f32 %v363, %v402
  %v412 = vadd.f32 %v364, %v404
  %s413 = scalar_lea.vmem %s2, 50
  %v414 = vld [vmem:[%s413] ss:$8 sm:$0x3]
  %v416 = vperm.slane %v414, 0
  %v417 = vperm.slane %v414, 1
  %v420 = vmul.f32 %v284, %v416
  %v421 = vmul.f32 %v285, %v417
  %v422 = vmul.f32 %v286, %v416
  %v423 = vmul.f32 %v287, %v417
  %v424 = vmul.f32 %v288, %v416
  %v425 = vmul.f32 %v289, %v417
  %v432 = vrot.slane %v420, 1
  %v433 = vrot.slane %v422, 1
  %v434 = vsel %vm296, %v432, %v433
  %v435 = vrot.slane %v421, 1
  %v436 = vrot.slane %v423, 1
  %v437 = vsel %vm296, %v435, %v436
  %v438 = vrot.slane %v424, 1
  %v439 = vsel %vm296, %v433, %v438
  %v440 = vrot.slane %v425, 1
  %v441 = vsel %vm296, %v436, %v440
  %v446 = vadd.f32 %v372, %v434
  %v447 = vadd.f32 %v373, %v437
  %v448 = vadd.f32 %v374, %v439
  %v449 = vadd.f32 %v375, %v441
  %450 = vrot.lane.b32.xlu0 %v299, 120
  %v451 = vpop.permute.xlu0 %450
  %452 = vrot.lane.b32.xlu0 %v304, 120
  %v453 = vpop.permute.xlu0 %452
  %454 = vrot.lane.b32.xlu0 %v302, 120
  %v455 = vpop.permute.xlu0 %454
  %456 = vrot.lane.b32.xlu0 %v306, 120
  %v457 = vpop.permute.xlu0 %456
  %v458 = vsel %vm236, %v451, %v455
  %v459 = vsel %vm236, %v453, %v457
  %v460 = vsel %vm236, %v455, %v451
  %v461 = vsel %vm236, %v457, %v453
  %s462 = scalar_lea.vmem %s2, 16
  %v463 = vld [vmem:[%s462] ss:$8 sm:$0x3]
  %v465 = vperm.slane %v463, 0
  %v466 = vperm.slane %v463, 1
  %v469 = vmul.f32 %v458, %v465
  %v470 = vmul.f32 %v460, %v466
  %v471 = vmul.f32 %v459, %v465
  %v472 = vmul.f32 %v461, %v466
  %v473 = vadd.f32 %v409, %v469
  %v474 = vadd.f32 %v410, %v470
  %v475 = vadd.f32 %v411, %v471
  %v476 = vadd.f32 %v412, %v472
  %s477 = scalar_lea.vmem %s2, 51
  %v478 = vld [vmem:[%s477] ss:$8 sm:$0x3]
  %v480 = vperm.slane %v478, 0
  %v481 = vperm.slane %v478, 1
  %v484 = vmul.f32 %v458, %v480
  %v485 = vmul.f32 %v460, %v481
  %v486 = vmul.f32 %v459, %v480
  %v487 = vmul.f32 %v461, %v481
  %v488 = vadd.f32 %v446, %v484
  %v489 = vadd.f32 %v447, %v485
  %v490 = vadd.f32 %v448, %v486
  %v491 = vadd.f32 %v449, %v487
  %492 = vrot.lane.b32.xlu0 %v299, 112
  %v493 = vpop.permute.xlu0 %492
  %494 = vrot.lane.b32.xlu0 %v304, 112
  %v495 = vpop.permute.xlu0 %494
  %496 = vrot.lane.b32.xlu0 %v302, 112
  %v497 = vpop.permute.xlu0 %496
  %498 = vrot.lane.b32.xlu0 %v306, 112
  %v499 = vpop.permute.xlu0 %498
  %v500 = vsel %vm264, %v493, %v497
  %v501 = vsel %vm264, %v495, %v499
  %v502 = vsel %vm264, %v497, %v493
  %v503 = vsel %vm264, %v499, %v495
  %s504 = scalar_lea.vmem %s2, 17
  %v505 = vld [vmem:[%s504] ss:$8 sm:$0x3]
  %v507 = vperm.slane %v505, 0
  %v508 = vperm.slane %v505, 1
  %v511 = vmul.f32 %v500, %v507
  %v512 = vmul.f32 %v502, %v508
  %v513 = vmul.f32 %v501, %v507
  %v514 = vmul.f32 %v503, %v508
  %v515 = vadd.f32 %v473, %v511
  %v516 = vadd.f32 %v474, %v512
  %v517 = vadd.f32 %v475, %v513
  %v518 = vadd.f32 %v476, %v514
  %519 = vrot.lane.b32.xlu0 %v114, 16
  %v520 = vpop.permute.xlu0 %519
  %521 = vrot.lane.b32.xlu0 %v116, 16
  %v522 = vpop.permute.xlu0 %521
  %523 = vrot.lane.b32.xlu0 %v115, 16
  %v524 = vpop.permute.xlu0 %523
  %525 = vrot.lane.b32.xlu0 %v117, 16
  %v526 = vpop.permute.xlu0 %525
  %v527 = vsel %vm170, %v520, %v524
  %v528 = vsel %vm170, %v522, %v526
  %v529 = vsel %vm170, %v524, %v520
  %v530 = vsel %vm170, %v526, %v522
  %s531 = scalar_lea.vmem %s2, 18
  %v532 = vld [vmem:[%s531] ss:$8 sm:$0x3]
  %v534 = vperm.slane %v532, 0
  %v535 = vperm.slane %v532, 1
  %v538 = vmul.f32 %v529, %v534
  %v539 = vmul.f32 %v527, %v535
  %v540 = vmul.f32 %v530, %v534
  %v541 = vmul.f32 %v528, %v535
  %v542 = vadd.f32 %v515, %v538
  %v543 = vadd.f32 %v516, %v539
  %v544 = vadd.f32 %v517, %v540
  %v545 = vadd.f32 %v518, %v541
  %546 = vrot.lane.b32.xlu0 %v114, 8
  %v547 = vpop.permute.xlu0 %546
  %548 = vrot.lane.b32.xlu0 %v116, 8
  %v549 = vpop.permute.xlu0 %548
  %550 = vrot.lane.b32.xlu0 %v115, 8
  %v551 = vpop.permute.xlu0 %550
  %552 = vrot.lane.b32.xlu0 %v117, 8
  %v553 = vpop.permute.xlu0 %552
  %v554 = vsel %vm193, %v547, %v551
  %v555 = vsel %vm193, %v549, %v553
  %v556 = vsel %vm193, %v551, %v547
  %v557 = vsel %vm193, %v553, %v549
  %s558 = scalar_lea.vmem %s2, 19
  %v559 = vld [vmem:[%s558] ss:$8 sm:$0x3]
  %v561 = vperm.slane %v559, 0
  %v562 = vperm.slane %v559, 1
  %v565 = vmul.f32 %v556, %v561
  %v566 = vmul.f32 %v554, %v562
  %v567 = vmul.f32 %v557, %v561
  %v568 = vmul.f32 %v555, %v562
  %v569 = vadd.f32 %v542, %v565
  %v570 = vadd.f32 %v543, %v566
  %v571 = vadd.f32 %v544, %v567
  %v572 = vadd.f32 %v545, %v568
  %s573 = scalar_lea.vmem %s2, 52
  %v574 = vld [vmem:[%s573] ss:$8 sm:$0x3]
  %v576 = vperm.slane %v574, 0
  %v577 = vperm.slane %v574, 1
  %v580 = vmul.f32 %v556, %v576
  %v581 = vmul.f32 %v554, %v577
  %v582 = vmul.f32 %v557, %v576
  %v583 = vmul.f32 %v555, %v577
  %v584 = vadd.f32 %v488, %v580
  %v585 = vadd.f32 %v489, %v581
  %v586 = vadd.f32 %v490, %v582
  %v587 = vadd.f32 %v491, %v583
  %s588 = scalar_lea.vmem %s2, 20
  %v589 = vld [vmem:[%s588] ss:$8 sm:$0x3]
  %v591 = vperm.slane %v589, 0
  %v592 = vperm.slane %v589, 1
  %v595 = vmul.f32 %v114, %v591
  %v596 = vmul.f32 %v115, %v592
  %v597 = vmul.f32 %v116, %v591
  %v598 = vmul.f32 %v117, %v592
  %v599 = vadd.f32 %v569, %v595
  %v600 = vadd.f32 %v570, %v596
  %v601 = vadd.f32 %v571, %v597
  %v602 = vadd.f32 %v572, %v598
  %s603 = scalar_lea.vmem %s2, 53
  %v604 = vld [vmem:[%s603] ss:$8 sm:$0x3]
  %v606 = vperm.slane %v604, 0
  %v607 = vperm.slane %v604, 1
  %v610 = vmul.f32 %v114, %v606
  %v611 = vmul.f32 %v115, %v607
  %v612 = vmul.f32 %v116, %v606
  %v613 = vmul.f32 %v117, %v607
  %v614 = vadd.f32 %v584, %v610
  %v615 = vadd.f32 %v585, %v611
  %v616 = vadd.f32 %v586, %v612
  %v617 = vadd.f32 %v587, %v613
  %618 = vrot.lane.b32.xlu0 %v114, 120
  %v619 = vpop.permute.xlu0 %618
  %620 = vrot.lane.b32.xlu0 %v116, 120
  %v621 = vpop.permute.xlu0 %620
  %622 = vrot.lane.b32.xlu0 %v115, 120
  %v623 = vpop.permute.xlu0 %622
  %624 = vrot.lane.b32.xlu0 %v117, 120
  %v625 = vpop.permute.xlu0 %624
  %v626 = vsel %vm236, %v619, %v623
  %v627 = vsel %vm236, %v621, %v625
  %v628 = vsel %vm236, %v623, %v619
  %v629 = vsel %vm236, %v625, %v621
  %s630 = scalar_lea.vmem %s2, 21
  %v631 = vld [vmem:[%s630] ss:$8 sm:$0x3]
  %v633 = vperm.slane %v631, 0
  %v634 = vperm.slane %v631, 1
  %v637 = vmul.f32 %v626, %v633
  %v638 = vmul.f32 %v628, %v634
  %v639 = vmul.f32 %v627, %v633
  %v640 = vmul.f32 %v629, %v634
  %v641 = vadd.f32 %v599, %v637
  %v642 = vadd.f32 %v600, %v638
  %v643 = vadd.f32 %v601, %v639
  %v644 = vadd.f32 %v602, %v640
  %s645 = scalar_lea.vmem %s2, 54
  %v646 = vld [vmem:[%s645] ss:$8 sm:$0x3]
  %v648 = vperm.slane %v646, 0
  %v649 = vperm.slane %v646, 1
  %v652 = vmul.f32 %v626, %v648
  %v653 = vmul.f32 %v628, %v649
  %v654 = vmul.f32 %v627, %v648
  %v655 = vmul.f32 %v629, %v649
  %v656 = vadd.f32 %v614, %v652
  %v657 = vadd.f32 %v615, %v653
  %v658 = vadd.f32 %v616, %v654
  %v659 = vadd.f32 %v617, %v655
  %660 = vrot.lane.b32.xlu0 %v114, 112
  %v661 = vpop.permute.xlu0 %660
  %662 = vrot.lane.b32.xlu0 %v116, 112
  %v663 = vpop.permute.xlu0 %662
  %664 = vrot.lane.b32.xlu0 %v115, 112
  %v665 = vpop.permute.xlu0 %664
  %666 = vrot.lane.b32.xlu0 %v117, 112
  %v667 = vpop.permute.xlu0 %666
  %v668 = vsel %vm264, %v661, %v665
  %v669 = vsel %vm264, %v663, %v667
  %v670 = vsel %vm264, %v665, %v661
  %v671 = vsel %vm264, %v667, %v663
  %s672 = scalar_lea.vmem %s2, 22
  %v673 = vld [vmem:[%s672] ss:$8 sm:$0x3]
  %v675 = vperm.slane %v673, 0
  %v676 = vperm.slane %v673, 1
  %v679 = vmul.f32 %v668, %v675
  %v680 = vmul.f32 %v670, %v676
  %v681 = vmul.f32 %v669, %v675
  %v682 = vmul.f32 %v671, %v676
  %v683 = vadd.f32 %v641, %v679
  %v684 = vadd.f32 %v642, %v680
  %v685 = vadd.f32 %v643, %v681
  %v686 = vadd.f32 %v644, %v682
  %v687 = vld [vmem:[#allocation2] sm:$0xf8]
  %v688 = vld [vmem:[#allocation2 + $0x8] sm:$0xf8]
  %v689 = vld [vmem:[#allocation2 + $0x20] sm:$0x7]
  %v690 = vld [vmem:[#allocation2 + $0x28] sm:$0x7]
  %vm695 = vcmask 1044480
  %v696 = vrot.slane %v687, 3
  %v697 = vrot.slane %v286, 3
  %v698 = vsel %vm695, %v696, %v697
  %v699 = vrot.slane %v688, 3
  %v700 = vrot.slane %v287, 3
  %v701 = vsel %vm695, %v699, %v700
  %v702 = vrot.slane %v689, 3
  %v703 = vsel %vm695, %v697, %v702
  %v704 = vrot.slane %v690, 3
  %v705 = vsel %vm695, %v700, %v704
  %710 = vrot.lane.b32.xlu0 %v698, 16
  %v711 = vpop.permute.xlu0 %710
  %712 = vrot.lane.b32.xlu0 %v703, 16
  %v713 = vpop.permute.xlu0 %712
  %714 = vrot.lane.b32.xlu0 %v701, 16
  %v715 = vpop.permute.xlu0 %714
  %716 = vrot.lane.b32.xlu0 %v705, 16
  %v717 = vpop.permute.xlu0 %716
  %v718 = vsel %vm170, %v711, %v715
  %v719 = vsel %vm170, %v713, %v717
  %v720 = vsel %vm170, %v715, %v711
  %v721 = vsel %vm170, %v717, %v713
  %s722 = scalar_lea.vmem %s2, 23
  %v723 = vld [vmem:[%s722] ss:$8 sm:$0x3]
  %v725 = vperm.slane %v723, 0
  %v726 = vperm.slane %v723, 1
  %v729 = vmul.f32 %v720, %v725
  %v730 = vmul.f32 %v718, %v726
  %v731 = vmul.f32 %v721, %v725
  %v732 = vmul.f32 %v719, %v726
  %v733 = vadd.f32 %v683, %v729
  %v734 = vadd.f32 %v684, %v730
  %v735 = vadd.f32 %v685, %v731
  %v736 = vadd.f32 %v686, %v732
  %737 = vrot.lane.b32.xlu0 %v698, 8
  %v738 = vpop.permute.xlu0 %737
  %739 = vrot.lane.b32.xlu0 %v703, 8
  %v740 = vpop.permute.xlu0 %739
  %741 = vrot.lane.b32.xlu0 %v701, 8
  %v742 = vpop.permute.xlu0 %741
  %743 = vrot.lane.b32.xlu0 %v705, 8
  %v744 = vpop.permute.xlu0 %743
  %v745 = vsel %vm193, %v738, %v742
  %v746 = vsel %vm193, %v740, %v744
  %v747 = vsel %vm193, %v742, %v738
  %v748 = vsel %vm193, %v744, %v740
  %s749 = scalar_lea.vmem %s2, 32
  %v750 = vld [vmem:[%s749] ss:$8 sm:$0x3]
  %v752 = vperm.slane %v750, 0
  %v753 = vperm.slane %v750, 1
  %v756 = vmul.f32 %v747, %v752
  %v757 = vmul.f32 %v745, %v753
  %v758 = vmul.f32 %v748, %v752
  %v759 = vmul.f32 %v746, %v753
  %v760 = vadd.f32 %v733, %v756
  %v761 = vadd.f32 %v734, %v757
  %v762 = vadd.f32 %v735, %v758
  %v763 = vadd.f32 %v736, %v759
  %s764 = scalar_lea.vmem %s2, 55
  %v765 = vld [vmem:[%s764] ss:$8 sm:$0x3]
  %v767 = vperm.slane %v765, 0
  %v768 = vperm.slane %v765, 1
  %v771 = vmul.f32 %v747, %v767
  %v772 = vmul.f32 %v745, %v768
  %v773 = vmul.f32 %v748, %v767
  %v774 = vmul.f32 %v746, %v768
  %v775 = vadd.f32 %v656, %v771
  %v776 = vadd.f32 %v657, %v772
  %v777 = vadd.f32 %v658, %v773
  %v778 = vadd.f32 %v659, %v774
  %s779 = scalar_lea.vmem %s2, 33
  %v780 = vld [vmem:[%s779] ss:$8 sm:$0x3]
  %v782 = vperm.slane %v780, 0
  %v783 = vperm.slane %v780, 1
  %v786 = vmul.f32 %v687, %v782
  %v787 = vmul.f32 %v688, %v783
  %v788 = vmul.f32 %v286, %v782
  %v789 = vmul.f32 %v287, %v783
  %v790 = vmul.f32 %v689, %v782
  %v791 = vmul.f32 %v690, %v783
  %v798 = vrot.slane %v786, 3
  %v799 = vrot.slane %v788, 3
  %v800 = vsel %vm695, %v798, %v799
  %v801 = vrot.slane %v787, 3
  %v802 = vrot.slane %v789, 3
  %v803 = vsel %vm695, %v801, %v802
  %v804 = vrot.slane %v790, 3
  %v805 = vsel %vm695, %v799, %v804
  %v806 = vrot.slane %v791, 3
  %v807 = vsel %vm695, %v802, %v806
  %v812 = vadd.f32 %v760, %v800
  %v813 = vadd.f32 %v761, %v803
  %v814 = vadd.f32 %v762, %v805
  %v815 = vadd.f32 %v763, %v807
  %s816 = scalar_lea.vmem %s2, 64
  %v817 = vld [vmem:[%s816] ss:$8 sm:$0x3]
  %v819 = vperm.slane %v817, 0
  %v820 = vperm.slane %v817, 1
  %v823 = vmul.f32 %v687, %v819
  %v824 = vmul.f32 %v688, %v820
  %v825 = vmul.f32 %v286, %v819
  %v826 = vmul.f32 %v287, %v820
  %v827 = vmul.f32 %v689, %v819
  %v828 = vmul.f32 %v690, %v820
  %v835 = vrot.slane %v823, 3
  %v836 = vrot.slane %v825, 3
  %v837 = vsel %vm695, %v835, %v836
  %v838 = vrot.slane %v824, 3
  %v839 = vrot.slane %v826, 3
  %v840 = vsel %vm695, %v838, %v839
  %v841 = vrot.slane %v827, 3
  %v842 = vsel %vm695, %v836, %v841
  %v843 = vrot.slane %v828, 3
  %v844 = vsel %vm695, %v839, %v843
  %v849 = vadd.f32 %v775, %v837
  %v850 = vadd.f32 %v776, %v840
  %v851 = vadd.f32 %v777, %v842
  %v852 = vadd.f32 %v778, %v844
  %853 = vrot.lane.b32.xlu0 %v698, 120
  %v854 = vpop.permute.xlu0 %853
  %855 = vrot.lane.b32.xlu0 %v703, 120
  %v856 = vpop.permute.xlu0 %855
  %857 = vrot.lane.b32.xlu0 %v701, 120
  %v858 = vpop.permute.xlu0 %857
  %859 = vrot.lane.b32.xlu0 %v705, 120
  %v860 = vpop.permute.xlu0 %859
  %v861 = vsel %vm236, %v854, %v858
  %v862 = vsel %vm236, %v856, %v860
  %v863 = vsel %vm236, %v858, %v854
  %v864 = vsel %vm236, %v860, %v856
  %s865 = scalar_lea.vmem %s2, 34
  %v866 = vld [vmem:[%s865] ss:$8 sm:$0x3]
  %v868 = vperm.slane %v866, 0
  %v869 = vperm.slane %v866, 1
  %v872 = vmul.f32 %v861, %v868
  %v873 = vmul.f32 %v863, %v869
  %v874 = vmul.f32 %v862, %v868
  %v875 = vmul.f32 %v864, %v869
  %v876 = vadd.f32 %v812, %v872
  %v877 = vadd.f32 %v813, %v873
  %v878 = vadd.f32 %v814, %v874
  %v879 = vadd.f32 %v815, %v875
  %s880 = scalar_lea.vmem %s2, 65
  %v881 = vld [vmem:[%s880] ss:$8 sm:$0x3]
  %v883 = vperm.slane %v881, 0
  %v884 = vperm.slane %v881, 1
  %v887 = vmul.f32 %v861, %v883
  %v888 = vmul.f32 %v863, %v884
  %v889 = vmul.f32 %v862, %v883
  %v890 = vmul.f32 %v864, %v884
  %v891 = vadd.f32 %v849, %v887
  %v892 = vadd.f32 %v850, %v888
  %v893 = vadd.f32 %v851, %v889
  %v894 = vadd.f32 %v852, %v890
  %895 = vrot.lane.b32.xlu0 %v698, 112
  %v896 = vpop.permute.xlu0 %895
  %897 = vrot.lane.b32.xlu0 %v703, 112
  %v898 = vpop.permute.xlu0 %897
  %899 = vrot.lane.b32.xlu0 %v701, 112
  %v900 = vpop.permute.xlu0 %899
  %901 = vrot.lane.b32.xlu0 %v705, 112
  %v902 = vpop.permute.xlu0 %901
  %v903 = vsel %vm264, %v896, %v900
  %v904 = vsel %vm264, %v898, %v902
  %v905 = vsel %vm264, %v900, %v896
  %v906 = vsel %vm264, %v902, %v898
  %s907 = scalar_lea.vmem %s2, 35
  %v908 = vld [vmem:[%s907] ss:$8 sm:$0x3]
  %v910 = vperm.slane %v908, 0
  %v911 = vperm.slane %v908, 1
  %v914 = vmul.f32 %v903, %v910
  %v915 = vmul.f32 %v905, %v911
  %v916 = vmul.f32 %v904, %v910
  %v917 = vmul.f32 %v906, %v911
  %v918 = vadd.f32 %v876, %v914
  %v919 = vadd.f32 %v877, %v915
  %v920 = vadd.f32 %v878, %v916
  %v921 = vadd.f32 %v879, %v917
  %v922 = vld [vmem:[#allocation2] sm:$0xf0]
  %v923 = vld [vmem:[#allocation2 + $0x8] sm:$0xf0]
  %v924 = vld [vmem:[#allocation2 + $0x20] sm:$0xf]
  %v925 = vld [vmem:[#allocation2 + $0x28] sm:$0xf]
  %vm930 = vcmask 1043456
  %v931 = vrot.slane %v922, 4
  %v932 = vrot.slane %v286, 4
  %v933 = vsel %vm930, %v931, %v932
  %v934 = vrot.slane %v923, 4
  %v935 = vrot.slane %v287, 4
  %v936 = vsel %vm930, %v934, %v935
  %v937 = vrot.slane %v924, 4
  %v938 = vsel %vm930, %v932, %v937
  %v939 = vrot.slane %v925, 4
  %v940 = vsel %vm930, %v935, %v939
  %945 = vrot.lane.b32.xlu0 %v933, 16
  %v946 = vpop.permute.xlu0 %945
  %947 = vrot.lane.b32.xlu0 %v938, 16
  %v948 = vpop.permute.xlu0 %947
  %949 = vrot.lane.b32.xlu0 %v936, 16
  %v950 = vpop.permute.xlu0 %949
  %951 = vrot.lane.b32.xlu0 %v940, 16
  %v952 = vpop.permute.xlu0 %951
  %v953 = vsel %vm170, %v946, %v950
  %v954 = vsel %vm170, %v948, %v952
  %v955 = vsel %vm170, %v950, %v946
  %v956 = vsel %vm170, %v952, %v948
  %s957 = scalar_lea.vmem %s2, 36
  %v958 = vld [vmem:[%s957] ss:$8 sm:$0x3]
  %v960 = vperm.slane %v958, 0
  %v961 = vperm.slane %v958, 1
  %v964 = vmul.f32 %v955, %v960
  %v965 = vmul.f32 %v953, %v961
  %v966 = vmul.f32 %v956, %v960
  %v967 = vmul.f32 %v954, %v961
  %v968 = vadd.f32 %v918, %v964
  %v969 = vadd.f32 %v919, %v965
  %v970 = vadd.f32 %v920, %v966
  %v971 = vadd.f32 %v921, %v967
  %972 = vrot.lane.b32.xlu0 %v933, 8
  %v973 = vpop.permute.xlu0 %972
  %974 = vrot.lane.b32.xlu0 %v938, 8
  %v975 = vpop.permute.xlu0 %974
  %976 = vrot.lane.b32.xlu0 %v936, 8
  %v977 = vpop.permute.xlu0 %976
  %978 = vrot.lane.b32.xlu0 %v940, 8
  %v979 = vpop.permute.xlu0 %978
  %v980 = vsel %vm193, %v973, %v977
  %v981 = vsel %vm193, %v975, %v979
  %v982 = vsel %vm193, %v977, %v973
  %v983 = vsel %vm193, %v979, %v975
  %s984 = scalar_lea.vmem %s2, 37
  %v985 = vld [vmem:[%s984] ss:$8 sm:$0x3]
  %v987 = vperm.slane %v985, 0
  %v988 = vperm.slane %v985, 1
  %v991 = vmul.f32 %v982, %v987
  %v992 = vmul.f32 %v980, %v988
  %v993 = vmul.f32 %v983, %v987
  %v994 = vmul.f32 %v981, %v988
  %v995 = vadd.f32 %v968, %v991
  %v996 = vadd.f32 %v969, %v992
  %v997 = vadd.f32 %v970, %v993
  %v998 = vadd.f32 %v971, %v994
  %s999 = scalar_lea.vmem %s2, 38
  %v1000 = vld [vmem:[%s999] ss:$8 sm:$0x3]
  %v1002 = vperm.slane %v1000, 0
  %v1003 = vperm.slane %v1000, 1
  %v1006 = vmul.f32 %v922, %v1002
  %v1007 = vmul.f32 %v923, %v1003
  %v1008 = vmul.f32 %v286, %v1002
  %v1009 = vmul.f32 %v287, %v1003
  %v1010 = vmul.f32 %v924, %v1002
  %v1011 = vmul.f32 %v925, %v1003
  %v1018 = vrot.slane %v1006, 4
  %v1019 = vrot.slane %v1008, 4
  %v1020 = vsel %vm930, %v1018, %v1019
  %v1021 = vrot.slane %v1007, 4
  %v1022 = vrot.slane %v1009, 4
  %v1023 = vsel %vm930, %v1021, %v1022
  %v1024 = vrot.slane %v1010, 4
  %v1025 = vsel %vm930, %v1019, %v1024
  %v1026 = vrot.slane %v1011, 4
  %v1027 = vsel %vm930, %v1022, %v1026
  %v1032 = vadd.f32 %v995, %v1020
  %v1033 = vadd.f32 %v996, %v1023
  %v1034 = vadd.f32 %v997, %v1025
  %v1035 = vadd.f32 %v998, %v1027
  %1036 = vrot.lane.b32.xlu0 %v933, 120
  %v1037 = vpop.permute.xlu0 %1036
  %1038 = vrot.lane.b32.xlu0 %v938, 120
  %v1039 = vpop.permute.xlu0 %1038
  %1040 = vrot.lane.b32.xlu0 %v936, 120
  %v1041 = vpop.permute.xlu0 %1040
  %1042 = vrot.lane.b32.xlu0 %v940, 120
  %v1043 = vpop.permute.xlu0 %1042
  %v1044 = vsel %vm236, %v1037, %v1041
  %v1045 = vsel %vm236, %v1039, %v1043
  %v1046 = vsel %vm236, %v1041, %v1037
  %v1047 = vsel %vm236, %v1043, %v1039
  %s1048 = scalar_lea.vmem %s2, 39
  %v1049 = vld [vmem:[%s1048] ss:$8 sm:$0x3]
  %v1051 = vperm.slane %v1049, 0
  %v1052 = vperm.slane %v1049, 1
  %v1055 = vmul.f32 %v1044, %v1051
  %v1056 = vmul.f32 %v1046, %v1052
  %v1057 = vmul.f32 %v1045, %v1051
  %v1058 = vmul.f32 %v1047, %v1052
  %v1059 = vadd.f32 %v1032, %v1055
  %v1060 = vadd.f32 %v1033, %v1056
  %v1061 = vadd.f32 %v1034, %v1057
  %v1062 = vadd.f32 %v1035, %v1058
  %1063 = vrot.lane.b32.xlu0 %v933, 112
  %v1064 = vpop.permute.xlu0 %1063
  %1065 = vrot.lane.b32.xlu0 %v938, 112
  %v1066 = vpop.permute.xlu0 %1065
  %1067 = vrot.lane.b32.xlu0 %v936, 112
  %v1068 = vpop.permute.xlu0 %1067
  %1069 = vrot.lane.b32.xlu0 %v940, 112
  %v1070 = vpop.permute.xlu0 %1069
  %v1071 = vsel %vm264, %v1064, %v1068
  %v1072 = vsel %vm264, %v1066, %v1070
  %v1073 = vsel %vm264, %v1068, %v1064
  %v1074 = vsel %vm264, %v1070, %v1066
  %s1075 = scalar_lea.vmem %s2, 48
  %v1076 = vld [vmem:[%s1075] ss:$8 sm:$0x3]
  %v1078 = vperm.slane %v1076, 0
  %v1079 = vperm.slane %v1076, 1
  %v1082 = vmul.f32 %v1071, %v1078
  %v1083 = vmul.f32 %v1073, %v1079
  %v1084 = vmul.f32 %v1072, %v1078
  %v1085 = vmul.f32 %v1074, %v1079
  %v1086 = vadd.f32 %v1059, %v1082
  %v1087 = vadd.f32 %v1060, %v1083
  %v1088 = vadd.f32 %v1061, %v1084
  %v1089 = vadd.f32 %v1062, %v1085
  %s1090 = scalar_lea.vmem %s2, 67
  %v1091 = vld [vmem:[%s1090] ss:$8 sm:$0x3]
  %v1093 = vperm.slane %v1091, 0
  %v1094 = vperm.slane %v1091, 1
  %v1097 = vadd.f32 %v1086, %v1093
  %v1098 = vadd.f32 %v1087, %v1094
  %v1099 = vadd.f32 %v1088, %v1093
  %v1100 = vadd.f32 %v1089, %v1094
  %v1101 = vmax.f32 %v1097, 0.0
  %v1102 = vmax.f32 %v1098, 0.0
  %v1103 = vmax.f32 %v1099, 0.0
  %v1104 = vmax.f32 %v1100, 0.0
  %v1105 = vmin.f32 %v1101, 6.0
  %v1106 = vmin.f32 %v1102, 6.0
  %v1107 = vmin.f32 %v1103, 6.0
  %v1108 = vmin.f32 %v1104, 6.0
  %s1109 = scalar_lea.vmem %s2, 68
  %v1110 = vld [vmem:[%s1109] ss:$8 sm:$0x3]
  %v1112 = vperm.slane %v1110, 0
  %v1113 = vperm.slane %v1110, 1
  %v1116 = vadd.f32 %v891, %v1112
  %v1117 = vadd.f32 %v892, %v1113
  %v1118 = vadd.f32 %v893, %v1112
  %v1119 = vadd.f32 %v894, %v1113
  %v1120 = vmax.f32 %v1116, 0.0
  %v1121 = vmax.f32 %v1117, 0.0
  %v1122 = vmax.f32 %v1118, 0.0
  %v1123 = vmax.f32 %v1119, 0.0
  %v1124 = vmin.f32 %v1120, 6.0
  %v1125 = vmin.f32 %v1121, 6.0
  %v1126 = vmin.f32 %v1122, 6.0
  %v1127 = vmin.f32 %v1123, 6.0
  %v1128 = vadd.f32 %v1105, %v1124
  %v1129 = vadd.f32 %v1106, %v1125
  %v1130 = vadd.f32 %v1107, %v1126
  %v1131 = vadd.f32 %v1108, %v1127
  %s1132 = scalar_lea.vmem %s2, 69
  %v1133 = vld [vmem:[%s1132] ss:$8 sm:$0x3]
  %v1135 = vperm.slane %v1133, 0
  %v1136 = vperm.slane %v1133, 1
  %v1139 = vadd.f32 %v152, %v1135
  %v1140 = vadd.f32 %v153, %v1136
  %v1141 = vadd.f32 %v154, %v1135
  %v1142 = vadd.f32 %v155, %v1136
  %v1143 = vmax.f32 %v1139, 0.0
  %v1144 = vmax.f32 %v1140, 0.0
  %v1145 = vmax.f32 %v1141, 0.0
  %v1146 = vmax.f32 %v1142, 0.0
  %v1147 = vmin.f32 %v1143, 6.0
  %v1148 = vmin.f32 %v1144, 6.0
  %v1149 = vmin.f32 %v1145, 6.0
  %v1150 = vmin.f32 %v1146, 6.0
  %v1151 = vadd.f32 %v1128, %v1147
  %v1152 = vadd.f32 %v1129, %v1148
  %v1153 = vadd.f32 %v1130, %v1149
  %v1154 = vadd.f32 %v1131, %v1150
  %v1155 = vld [vmem:[%s3] sm:$0xff]
  %v1156 = vld [vmem:[%s3 + $0x8] sm:$0xff]
  %v1157 = vld [vmem:[%s3 + $0x10] sm:$0xff]
  %v1158 = vld [vmem:[%s3 + $0x18] sm:$0xff]
  %v1159 = vld [vmem:[%s3 + $0x20] sm:$0xff]
  %v1160 = vld [vmem:[%s3 + $0x28] sm:$0xff]
  %v1161 = vld [vmem:[%s3 + $0x30] sm:$0xff]
  %v1162 = vld [vmem:[%s3 + $0x38] sm:$0xff]
  %v1163 = vld [vmem:[%s3 + $0x40] sm:$0xff]
  %v1164 = vld [vmem:[%s3 + $0x48] sm:$0xff]
  %v1165 = vld [vmem:[%s3 + $0x50] sm:$0xff]
  %v1166 = vld [vmem:[%s3 + $0x58] sm:$0xff]
  %v1167 = vld [vmem:[%s3 + $0x60] sm:$0xff]
  %v1168 = vld [vmem:[%s3 + $0x68] sm:$0xff]
  %v1169 = vld [vmem:[%s3 + $0x70] sm:$0xff]
  %v1170 = vld [vmem:[%s3 + $0x78] sm:$0xff]
  %v1171 = vld [vmem:[%s3 + $0x80] sm:$0xff]
  %v1172 = vld [vmem:[%s3 + $0x88] sm:$0xff]
  %v1173 = vld [vmem:[%s3 + $0x90] sm:$0xff]
  %v1174 = vld [vmem:[%s3 + $0x98] sm:$0xff]
  %v1175 = vld [vmem:[%s3 + $0xa0] sm:$0xff]
  %v1176 = vld [vmem:[%s3 + $0xa8] sm:$0xff]
  %v1177 = vld [vmem:[%s3 + $0xb0] sm:$0xff]
  %v1178 = vld [vmem:[%s3 + $0xb8] sm:$0xff]
  %v1179 = vld [vmem:[%s3 + $0xc0] sm:$0xff]
  %v1180 = vld [vmem:[%s3 + $0xc8] sm:$0xff]
  %v1181 = vld [vmem:[%s3 + $0xd0] sm:$0xff]
  %v1182 = vld [vmem:[%s3 + $0xd8] sm:$0xff]
  %v1183 = vld [vmem:[%s3 + $0xe0] sm:$0xff]
  %v1184 = vld [vmem:[%s3 + $0xe8] sm:$0xff]
  %v1185 = vld [vmem:[%s3 + $0xf0] sm:$0xff]
  %v1186 = vld [vmem:[%s3 + $0xf8] sm:$0xff]
  %v1187 = vld [vmem:[%s3 + $0x100] sm:$0xff]
  %v1188 = vld [vmem:[%s3 + $0x108] sm:$0xff]
  %v1189 = vld [vmem:[%s3 + $0x110] sm:$0xff]
  %v1190 = vld [vmem:[%s3 + $0x118] sm:$0xff]
  %v1191 = vld [vmem:[%s3 + $0x120] sm:$0xff]
  %v1192 = vld [vmem:[%s3 + $0x128] sm:$0xff]
  %v1193 = vld [vmem:[%s3 + $0x130] sm:$0xff]
  %v1194 = vld [vmem:[%s3 + $0x138] sm:$0xff]
  %v1195 = vld [vmem:[%s3 + $0x140] sm:$0xff]
  %v1196 = vld [vmem:[%s3 + $0x148] sm:$0xff]
  %v1197 = vld [vmem:[%s3 + $0x150] sm:$0xff]
  %v1198 = vld [vmem:[%s3 + $0x158] sm:$0xff]
  %v1199 = vld [vmem:[%s3 + $0x160] sm:$0xff]
  %v1200 = vld [vmem:[%s3 + $0x168] sm:$0xff]
  %v1201 = vld [vmem:[%s3 + $0x170] sm:$0xff]
  %v1202 = vld [vmem:[%s3 + $0x178] sm:$0xff]
  %v1203 = vld [vmem:[%s3 + $0x180] sm:$0xff]
  %v1204 = vld [vmem:[%s3 + $0x188] sm:$0xff]
  %v1205 = vld [vmem:[%s3 + $0x190] sm:$0xff]
  %v1206 = vld [vmem:[%s3 + $0x198] sm:$0xff]
  %v1207 = vld [vmem:[%s3 + $0x1a0] sm:$0xff]
  %v1208 = vld [vmem:[%s3 + $0x1a8] sm:$0xff]
  %v1209 = vld [vmem:[%s3 + $0x1b0] sm:$0xff]
  %v1210 = vld [vmem:[%s3 + $0x1b8] sm:$0xff]
  %v1211 = vld [vmem:[%s3 + $0x1c0] sm:$0xff]
  %v1212 = vld [vmem:[%s3 + $0x1c8] sm:$0xff]
  %v1213 = vld [vmem:[%s3 + $0x1d0] sm:$0xff]
  %v1214 = vld [vmem:[%s3 + $0x1d8] sm:$0xff]
  %v1215 = vld [vmem:[%s3 + $0x1e0] sm:$0xff]
  %v1216 = vld [vmem:[%s3 + $0x1e8] sm:$0xff]
  %v1217 = vld [vmem:[%s3 + $0x1f0] sm:$0xff]
  %v1218 = vld [vmem:[%s3 + $0x1f8] sm:$0xff]
  %v1219 = vld [vmem:[%s3 + $0x200] sm:$0xff]
  %v1220 = vld [vmem:[%s3 + $0x208] sm:$0xff]
  %v1221 = vld [vmem:[%s3 + $0x210] sm:$0xff]
  %v1222 = vld [vmem:[%s3 + $0x218] sm:$0xff]
  %v1223 = vld [vmem:[%s3 + $0x220] sm:$0xff]
  %v1224 = vld [vmem:[%s3 + $0x228] sm:$0xff]
  %v1225 = vld [vmem:[%s3 + $0x230] sm:$0xff]
  %v1226 = vld [vmem:[%s3 + $0x238] sm:$0xff]
  %v1227 = vld [vmem:[%s3 + $0x240] sm:$0xff]
  %v1228 = vld [vmem:[%s3 + $0x248] sm:$0xff]
  %v1229 = vld [vmem:[%s3 + $0x250] sm:$0xff]
  %v1230 = vld [vmem:[%s3 + $0x258] sm:$0xff]
  %v1231 = vld [vmem:[%s3 + $0x260] sm:$0xff]
  %v1232 = vld [vmem:[%s3 + $0x268] sm:$0xff]
  %v1233 = vld [vmem:[%s3 + $0x270] sm:$0xff]
  %v1234 = vld [vmem:[%s3 + $0x278] sm:$0xff]
  %v1235 = vld [vmem:[%s3 + $0x280] sm:$0xff]
  %v1236 = vld [vmem:[%s3 + $0x288] sm:$0xff]
  %v1237 = vld [vmem:[%s3 + $0x290] sm:$0xff]
  %v1238 = vld [vmem:[%s3 + $0x298] sm:$0xff]
  %v1239 = vld [vmem:[%s3 + $0x2a0] sm:$0xff]
  %v1240 = vld [vmem:[%s3 + $0x2a8] sm:$0xff]
  %v1241 = vld [vmem:[%s3 + $0x2b0] sm:$0xff]
  %v1242 = vld [vmem:[%s3 + $0x2b8] sm:$0xff]
  %v1243 = vld [vmem:[%s3 + $0x2c0] sm:$0xff]
  %v1244 = vld [vmem:[%s3 + $0x2c8] sm:$0xff]
  %v1245 = vld [vmem:[%s3 + $0x2d0] sm:$0xff]
  %v1246 = vld [vmem:[%s3 + $0x2d8] sm:$0xff]
  %v1247 = vld [vmem:[%s3 + $0x2e0] sm:$0xff]
  %v1248 = vld [vmem:[%s3 + $0x2e8] sm:$0xff]
  %v1249 = vld [vmem:[%s3 + $0x2f0] sm:$0xff]
  %v1250 = vld [vmem:[%s3 + $0x2f8] sm:$0xff]
  %v1251 = vld [vmem:[%s4] sm:$0xff]
  %v1252 = vld [vmem:[%s4 + $0x8] sm:$0xff]
  %v1253 = vld [vmem:[%s4 + $0x10] sm:$0xff]
  %v1254 = vld [vmem:[%s4 + $0x18] sm:$0xff]
  %v1255 = vld [vmem:[%s4 + $0x20] sm:$0xff]
  %v1256 = vld [vmem:[%s4 + $0x28] sm:$0xff]
  %v1257 = vld [vmem:[%s4 + $0x30] sm:$0xff]
  %v1258 = vld [vmem:[%s4 + $0x38] sm:$0xff]
  %v1259 = vld [vmem:[%s4 + $0x40] sm:$0xff]
  %v1260 = vld [vmem:[%s4 + $0x48] sm:$0xff]
  %v1261 = vld [vmem:[%s4 + $0x50] sm:$0xff]
  %v1262 = vld [vmem:[%s4 + $0x58] sm:$0xff]
  %v1263 = vld [vmem:[%s4 + $0x60] sm:$0xff]
  %v1264 = vld [vmem:[%s4 + $0x68] sm:$0xff]
  %v1265 = vld [vmem:[%s4 + $0x70] sm:$0xff]
  %v1266 = vld [vmem:[%s4 + $0x78] sm:$0xff]
  %v1267 = vld [vmem:[%s4 + $0x80] sm:$0xff]
  %v1268 = vld [vmem:[%s4 + $0x88] sm:$0xff]
  %v1269 = vld [vmem:[%s4 + $0x90] sm:$0xff]
  %v1270 = vld [vmem:[%s4 + $0x98] sm:$0xff]
  %v1271 = vld [vmem:[%s4 + $0xa0] sm:$0xff]
  %v1272 = vld [vmem:[%s4 + $0xa8] sm:$0xff]
  %v1273 = vld [vmem:[%s4 + $0xb0] sm:$0xff]
  %v1274 = vld [vmem:[%s4 + $0xb8] sm:$0xff]
  %v1275 = vld [vmem:[%s4 + $0xc0] sm:$0xff]
  %v1276 = vld [vmem:[%s4 + $0xc8] sm:$0xff]
  %v1277 = vld [vmem:[%s4 + $0xd0] sm:$0xff]
  %v1278 = vld [vmem:[%s4 + $0xd8] sm:$0xff]
  %v1279 = vld [vmem:[%s4 + $0xe0] sm:$0xff]
  %v1280 = vld [vmem:[%s4 + $0xe8] sm:$0xff]
  %v1281 = vld [vmem:[%s4 + $0xf0] sm:$0xff]
  %v1282 = vld [vmem:[%s4 + $0xf8] sm:$0xff]
  %v1283 = vld [vmem:[%s4 + $0x100] sm:$0xff]
  %v1284 = vld [vmem:[%s4 + $0x108] sm:$0xff]
  %v1285 = vld [vmem:[%s4 + $0x110] sm:$0xff]
  %v1286 = vld [vmem:[%s4 + $0x118] sm:$0xff]
  %v1287 = vld [vmem:[%s4 + $0x120] sm:$0xff]
  %v1288 = vld [vmem:[%s4 + $0x128] sm:$0xff]
  %v1289 = vld [vmem:[%s4 + $0x130] sm:$0xff]
  %v1290 = vld [vmem:[%s4 + $0x138] sm:$0xff]
  %v1291 = vld [vmem:[%s4 + $0x140] sm:$0xff]
  %v1292 = vld [vmem:[%s4 + $0x148] sm:$0xff]
  %v1293 = vld [vmem:[%s4 + $0x150] sm:$0xff]
  %v1294 = vld [vmem:[%s4 + $0x158] sm:$0xff]
  %v1295 = vld [vmem:[%s4 + $0x160] sm:$0xff]
  %v1296 = vld [vmem:[%s4 + $0x168] sm:$0xff]
  %v1297 = vld [vmem:[%s4 + $0x170] sm:$0xff]
  %v1298 = vld [vmem:[%s4 + $0x178] sm:$0xff]
  %1299 = vmatpush.msra.mxu0 %v1296
  %1300 = vmatpush.msra.mxu0 %v1293
  %1301 = vmatpush.msra.mxu0 %v1290
  %1302 = vmatpush.msra.mxu0 %v1287
  %1303 = vmatpush.msra.mxu0 %v1284
  %1304 = vmatpush.msra.mxu0 %v1281
  %1305 = vmatpush.msra.mxu0 %v1278
  %1306 = vmatpush.msra.mxu0 %v1275
  %1307 = vmatpush.msra.mxu0 %v1272
  %1308 = vmatpush.msra.mxu0 %v1269
  %1309 = vmatpush.msra.mxu0 %v1266
  %1310 = vmatpush.msra.mxu0 %v1263
  %1311 = vmatpush.msra.mxu0 %v1260
  %1312 = vmatpush.msra.mxu0 %v1257
  %1313 = vmatpush.msra.mxu0 %v1254
  %1314 = vmatpush.msra.mxu0 %v1251
  %1315 = vmatmul.f32.gmra.mxu0 %v23
  %v1316 = vpop.f32.mrf.mxu0
  %v1317 = vadd.f32 0.0, %v1316
  %1318 = vmatmul.f32.gmra.mxu0 %v24
  %v1319 = vpop.f32.mrf.mxu0
  %v1320 = vadd.f32 0.0, %v1319
  %1321 = vdwg.mxu0
  %1322 = vmatpush.msra.mxu0 %v1297
  %1323 = vmatpush.msra.mxu0 %v1294
  %1324 = vmatpush.msra.mxu0 %v1291
  %1325 = vmatpush.msra.mxu0 %v1288
  %1326 = vmatpush.msra.mxu0 %v1285
  %1327 = vmatpush.msra.mxu0 %v1282
  %1328 = vmatpush.msra.mxu0 %v1279
  %1329 = vmatpush.msra.mxu0 %v1276
  %1330 = vmatpush.msra.mxu0 %v1273
  %1331 = vmatpush.msra.mxu0 %v1270
  %1332 = vmatpush.msra.mxu0 %v1267
  %1333 = vmatpush.msra.mxu0 %v1264
  %1334 = vmatpush.msra.mxu0 %v1261
  %1335 = vmatpush.msra.mxu0 %v1258
  %1336 = vmatpush.msra.mxu0 %v1255
  %1337 = vmatpush.msra.mxu0 %v1252
  %1338 = vmatmul.f32.gmra.mxu0 %v23
  %v1339 = vpop.f32.mrf.mxu0
  %v1340 = vadd.f32 0.0, %v1339
  %1341 = vmatmul.f32.gmra.mxu0 %v24
  %v1342 = vpop.f32.mrf.mxu0
  %v1343 = vadd.f32 0.0, %v1342
  %1344 = vdwg.mxu0
  %1345 = vmatpush.msra.mxu0 %v1298
  %1346 = vmatpush.msra.mxu0 %v1295
  %1347 = vmatpush.msra.mxu0 %v1292
  %1348 = vmatpush.msra.mxu0 %v1289
  %1349 = vmatpush.msra.mxu0 %v1286
  %1350 = vmatpush.msra.mxu0 %v1283
  %1351 = vmatpush.msra.mxu0 %v1280
  %1352 = vmatpush.msra.mxu0 %v1277
  %1353 = vmatpush.msra.mxu0 %v1274
  %1354 = vmatpush.msra.mxu0 %v1271
  %1355 = vmatpush.msra.mxu0 %v1268
  %1356 = vmatpush.msra.mxu0 %v1265
  %1357 = vmatpush.msra.mxu0 %v1262
  %1358 = vmatpush.msra.mxu0 %v1259
  %1359 = vmatpush.msra.mxu0 %v1256
  %1360 = vmatpush.msra.mxu0 %v1253
  %1361 = vmatmul.f32.gmra.mxu0 %v23
  %v1362 = vpop.f32.mrf.mxu0
  %v1363 = vadd.f32 0.0, %v1362
  %1364 = vmatmul.f32.gmra.mxu0 %v24
  %v1365 = vpop.f32.mrf.mxu0
  %v1366 = vadd.f32 0.0, %v1365
  %1367 = vdwg.mxu0
  %1368 = vmatpush.msra.mxu0 %v1200
  %1369 = vmatpush.msra.mxu0 %v1197
  %1370 = vmatpush.msra.mxu0 %v1194
  %1371 = vmatpush.msra.mxu0 %v1191
  %1372 = vmatpush.msra.mxu0 %v1188
  %1373 = vmatpush.msra.mxu0 %v1185
  %1374 = vmatpush.msra.mxu0 %v1182
  %1375 = vmatpush.msra.mxu0 %v1179
  %1376 = vmatpush.msra.mxu0 %v1176
  %1377 = vmatpush.msra.mxu0 %v1173
  %1378 = vmatpush.msra.mxu0 %v1170
  %1379 = vmatpush.msra.mxu0 %v1167
  %1380 = vmatpush.msra.mxu0 %v1164
  %1381 = vmatpush.msra.mxu0 %v1161
  %1382 = vmatpush.msra.mxu0 %v1158
  %1383 = vmatpush.msra.mxu0 %v1155
  %1384 = vmatmul.f32.gmra.mxu0 %v1151
  %v1385 = vpop.f32.mrf.mxu0
  %v1386 = vadd.f32 %v1317, %v1385
  %1387 = vmatmul.f32.gmra.mxu0 %v1153
  %v1388 = vpop.f32.mrf.mxu0
  %v1389 = vadd.f32 %v1320, %v1388
  %1390 = vdwg.mxu0
  %1391 = vmatpush.msra.mxu0 %v1248
  %1392 = vmatpush.msra.mxu0 %v1245
  %1393 = vmatpush.msra.mxu0 %v1242
  %1394 = vmatpush.msra.mxu0 %v1239
  %1395 = vmatpush.msra.mxu0 %v1236
  %1396 = vmatpush.msra.mxu0 %v1233
  %1397 = vmatpush.msra.mxu0 %v1230
  %1398 = vmatpush.msra.mxu0 %v1227
  %1399 = vmatpush.msra.mxu0 %v1224
  %1400 = vmatpush.msra.mxu0 %v1221
  %1401 = vmatpush.msra.mxu0 %v1218
  %1402 = vmatpush.msra.mxu0 %v1215
  %1403 = vmatpush.msra.mxu0 %v1212
  %1404 = vmatpush.msra.mxu0 %v1209
  %1405 = vmatpush.msra.mxu0 %v1206
  %1406 = vmatpush.msra.mxu0 %v1203
  %1407 = vmatmul.f32.gmra.mxu0 %v1152
  %v1408 = vpop.f32.mrf.mxu0
  %v1409 = vadd.f32 %v1386, %v1408
  %1410 = vmatmul.f32.gmra.mxu0 %v1154
  %v1411 = vpop.f32.mrf.mxu0
  %v1412 = vadd.f32 %v1389, %v1411
  %1413 = vdwg.mxu0
  %1414 = vmatpush.msra.mxu0 %v1201
  %1415 = vmatpush.msra.mxu0 %v1198
  %1416 = vmatpush.msra.mxu0 %v1195
  %1417 = vmatpush.msra.mxu0 %v1192
  %1418 = vmatpush.msra.mxu0 %v1189
  %1419 = vmatpush.msra.mxu0 %v1186
  %1420 = vmatpush.msra.mxu0 %v1183
  %1421 = vmatpush.msra.mxu0 %v1180
  %1422 = vmatpush.msra.mxu0 %v1177
  %1423 = vmatpush.msra.mxu0 %v1174
  %1424 = vmatpush.msra.mxu0 %v1171
  %1425 = vmatpush.msra.mxu0 %v1168
  %1426 = vmatpush.msra.mxu0 %v1165
  %1427 = vmatpush.msra.mxu0 %v1162
  %1428 = vmatpush.msra.mxu0 %v1159
  %1429 = vmatpush.msra.mxu0 %v1156
  %1430 = vmatmul.f32.gmra.mxu0 %v1151
  %v1431 = vpop.f32.mrf.mxu0
  %v1432 = vadd.f32 %v1340, %v1431
  %1433 = vmatmul.f32.gmra.mxu0 %v1153
  %v1434 = vpop.f32.mrf.mxu0
  %v1435 = vadd.f32 %v1343, %v1434
  %1436 = vdwg.mxu0
  %1437 = vmatpush.msra.mxu0 %v1249
  %1438 = vmatpush.msra.mxu0 %v1246
  %1439 = vmatpush.msra.mxu0 %v1243
  %1440 = vmatpush.msra.mxu0 %v1240
  %1441 = vmatpush.msra.mxu0 %v1237
  %1442 = vmatpush.msra.mxu0 %v1234
  %1443 = vmatpush.msra.mxu0 %v1231
  %1444 = vmatpush.msra.mxu0 %v1228
  %1445 = vmatpush.msra.mxu0 %v1225
  %1446 = vmatpush.msra.mxu0 %v1222
  %1447 = vmatpush.msra.mxu0 %v1219
  %1448 = vmatpush.msra.mxu0 %v1216
  %1449 = vmatpush.msra.mxu0 %v1213
  %1450 = vmatpush.msra.mxu0 %v1210
  %1451 = vmatpush.msra.mxu0 %v1207
  %1452 = vmatpush.msra.mxu0 %v1204
  %1453 = vmatmul.f32.gmra.mxu0 %v1152
  %v1454 = vpop.f32.mrf.mxu0
  %v1455 = vadd.f32 %v1432, %v1454
  %1456 = vmatmul.f32.gmra.mxu0 %v1154
  %v1457 = vpop.f32.mrf.mxu0
  %v1458 = vadd.f32 %v1435, %v1457
  %1459 = vdwg.mxu0
  %1460 = vmatpush.msra.mxu0 %v1202
  %1461 = vmatpush.msra.mxu0 %v1199
  %1462 = vmatpush.msra.mxu0 %v1196
  %1463 = vmatpush.msra.mxu0 %v1193
  %1464 = vmatpush.msra.mxu0 %v1190
  %1465 = vmatpush.msra.mxu0 %v1187
  %1466 = vmatpush.msra.mxu0 %v1184
  %1467 = vmatpush.msra.mxu0 %v1181
  %1468 = vmatpush.msra.mxu0 %v1178
  %1469 = vmatpush.msra.mxu0 %v1175
  %1470 = vmatpush.msra.mxu0 %v1172
  %1471 = vmatpush.msra.mxu0 %v1169
  %1472 = vmatpush.msra.mxu0 %v1166
  %1473 = vmatpush.msra.mxu0 %v1163
  %1474 = vmatpush.msra.mxu0 %v1160
  %1475 = vmatpush.msra.mxu0 %v1157
  %1476 = vmatmul.f32.gmra.mxu0 %v1151
  %v1477 = vpop.f32.mrf.mxu0
  %v1478 = vadd.f32 %v1363, %v1477
  %1479 = vmatmul.f32.gmra.mxu0 %v1153
  %v1480 = vpop.f32.mrf.mxu0
  %v1481 = vadd.f32 %v1366, %v1480
  %1482 = vdwg.mxu0
  %1483 = vmatpush.msra.mxu0 %v1250
  %1484 = vmatpush.msra.mxu0 %v1247
  %1485 = vmatpush.msra.mxu0 %v1244
  %1486 = vmatpush.msra.mxu0 %v1241
  %1487 = vmatpush.msra.mxu0 %v1238
  %1488 = vmatpush.msra.mxu0 %v1235
  %1489 = vmatpush.msra.mxu0 %v1232
  %1490 = vmatpush.msra.mxu0 %v1229
  %1491 = vmatpush.msra.mxu0 %v1226
  %1492 = vmatpush.msra.mxu0 %v1223
  %1493 = vmatpush.msra.mxu0 %v1220
  %1494 = vmatpush.msra.mxu0 %v1217
  %1495 = vmatpush.msra.mxu0 %v1214
  %1496 = vmatpush.msra.mxu0 %v1211
  %1497 = vmatpush.msra.mxu0 %v1208
  %1498 = vmatpush.msra.mxu0 %v1205
  %1499 = vmatmul.f32.gmra.mxu0 %v1152
  %v1500 = vpop.f32.mrf.mxu0
  %v1501 = vadd.f32 %v1478, %v1500
  %1502 = vmatmul.f32.gmra.mxu0 %v1154
  %v1503 = vpop.f32.mrf.mxu0
  %v1504 = vadd.f32 %v1481, %v1503
  %1505 = vdwg.mxu0
  %v1506 = vld [vmem:[%s5] sm:$0x7]
  %v1508 = vperm.slane %v1506, 0
  %v1509 = vperm.slane %v1506, 1
  %v1510 = vperm.slane %v1506, 2
  %v1514 = vadd.f32 %v1409, %v1508
  %v1515 = vadd.f32 %v1455, %v1509
  %v1516 = vadd.f32 %v1501, %v1510
  %v1517 = vadd.f32 %v1412, %v1508
  %v1518 = vadd.f32 %v1458, %v1509
  %v1519 = vadd.f32 %v1504, %v1510
  %1520 = vst [vmem:[%s6] sm:$0xff] %v1514
  %1521 = vst [vmem:[%s6 + $0x8] sm:$0xff] %v1515
  %1522 = vst [vmem:[%s6 + $0x10] sm:$0xff] %v1516
  %1523 = vst [vmem:[%s6 + $0x18] sm:$0xff] %v1517
  %1524 = vst [vmem:[%s6 + $0x20] sm:$0xff] %v1518
  %1525 = vst [vmem:[%s6 + $0x28] sm:$0xff] %v1519
  // Predicated region
  $region26: #{mscb_pallas.1} parent=0 // pred_check
    _
  $region27: #{mscb_pallas.1} parent=0 // pred_check_branch
    %1527 = sbr.rel (0) target = $region29
  $region28: #{mscb_pallas.1} parent=0 // pred_region
    _
  $region29: #{mscb_pallas.1} parent=0 // pred_fallthru
    _
  // Predicated region
  $region30: #{mscb_pallas.1} parent=0 // pred_check
    _
  $region31: #{mscb_pallas.1} parent=0 // pred_check_branch
    %1529 = sbr.rel (0) target = $region33
  $region32: #{mscb_pallas.1} parent=0 // pred_region
    _
  $region33: #{mscb_pallas.1} parent=0 // pred_fallthru
    _

</llo_original>
